<compile_context>
chip_gen: v7x
topology: tpu7x:2x2x1
jax: 0.10.0
libtpu: 0.0.40
codegen_flags: <defaults>
</compile_context>

<pallas_src>
import math
import jax
import jax.numpy as jnp
from jax import lax
from jax.experimental import pallas as pl
from jax.experimental.pallas import tpu as pltpu

# ---------------- model hyper-params (args) ----------------
B, SX, SY = 2, 8, 16          # batch, x-seq, y-seq
H, NH, FF = 32, 4, 64         # hidden_size, multi_head, ff_size
DH = H // NH                  # head dim
EPS = 1e-6                    # LayerNorm eps
NEG = -1e9                    # masked_fill constant

RX, RY = B * SX, B * SY       # flattened row counts (16, 32)
LANES = 256                   # packed slab width (lane-aligned, 2 vreg groups)

# A-slab lane layout (per attention block): [Wvm | Wk | Wq'] then zero pad.
C_V = 0                       # vproj lanes 0:128  (exactly the first vreg group)
C_K = NH * H                  # k lanes 128:160
C_Q = NH * H + H              # q lanes 160:192

# bf16 weight-matrix slab rows
RW_A1 = 0                     # MHA1 fused weights, rows 0:32
RW_A2 = H                     # MHA2 fused weights, rows 32:64
RW_F1 = 2 * H                 # FFN W1 (H x FF), rows 64:96   (lanes 0:FF)
RW_F2 = 3 * H                 # FFN W2 (FF x H), rows 96:160  (lanes 0:H)

# f32 bias / LayerNorm slab rows
RV_B1, RV_O1, RV_B2, RV_O2 = 0, 1, 2, 3      # attn bias rows / folded output biases
RV_BF1, RV_BF2 = 4, 5                        # FFN biases
RV_G1, RV_E1, RV_G2, RV_E2, RV_G3, RV_E3 = 6, 7, 8, 9, 10, 11


# ---------------- the Pallas kernel (single invocation, everything in VMEM) ----------------
def sga_kernel(x_ref, y_ref, mask_ref, w_ref, v_ref, o_ref):
    x = x_ref[...]                       # (RX, H)  f32
    y = y_ref[...]                       # (RY, H)  f32
    m_self = mask_ref[:, 0:RX]           # (RX, RX) additive 0 / -1e9
    m_cross = mask_ref[:, RX:RX + RY]    # (RX, RY) additive 0 / -1e9

    def layernorm(t, g_row, b_row):
        g = v_ref[g_row:g_row + 1, 0:H]
        bb = v_ref[b_row:b_row + 1, 0:H]
        mean = jnp.mean(t, axis=-1, keepdims=True)
        d = t - mean
        # torch Tensor.std(): unbiased (H-1), eps added to std (not var).
        var = jnp.sum(d * d, axis=-1, keepdims=True) * (1.0 / (H - 1))
        inv = pl.reciprocal(jnp.sqrt(var) + EPS, approx=True)
        return g * (d * inv) + bb

    def attend(q_bf, kv_bf, madd):
        # q_bf:  (Rq, H)    bf16, pre-scaled by 1/sqrt(DH)
        # kv_bf: (Rk, 256)  bf16, vproj in lanes 0:128, k in lanes 128:160
        # madd:  (Rq, Rk)   f32 additive mask (key mask + cross-batch block mask)
        acc = None
        for h in range(NH):                              # static unroll, NH = 4
            qh = q_bf[:, h * DH:(h + 1) * DH]
            kh = kv_bf[:, C_K + h * DH:C_K + (h + 1) * DH]
            s = lax.dot_general(qh, kh, (((1,), (1,)), ((), ())),
                                preferred_element_type=jnp.float32)
            s = s + madd
            s = s - jnp.max(s, axis=-1, keepdims=True)
            p = jnp.exp(s)
            p = p * pl.reciprocal(jnp.sum(p, axis=-1, keepdims=True), approx=True)
            vh = kv_bf[:, h * H:(h + 1) * H]             # within first vreg group
            oh = jnp.dot(p.astype(jnp.bfloat16), vh,
                         preferred_element_type=jnp.float32)
            acc = oh if acc is None else acc + oh
        return acc                                       # (Rq, H) f32, heads merged

    # ---- x = norm1(x + mhatt1(v=x, k=x, q=x, mask=x_mask)) ----
    w1 = w_ref[RW_A1:RW_A1 + H, :]                       # (H, 256) bf16
    proj1 = jnp.dot(x.astype(jnp.bfloat16), w1,
                    preferred_element_type=jnp.float32) + v_ref[RV_B1:RV_B1 + 1, :]
    p1 = proj1.astype(jnp.bfloat16)
    att1 = attend(p1[:, C_Q:C_Q + H], p1, m_self) + v_ref[RV_O1:RV_O1 + 1, 0:H]
    x = layernorm(x + att1, RV_G1, RV_E1)

    # ---- x = norm2(x + mhatt2(v=y, k=y, q=x, mask=y_mask)) ----
    w2 = w_ref[RW_A2:RW_A2 + H, :]                       # (H, 256) bf16
    q2 = jnp.dot(x.astype(jnp.bfloat16), w2[:, C_Q:C_Q + H],
                 preferred_element_type=jnp.float32) + v_ref[RV_B2:RV_B2 + 1, C_Q:C_Q + H]
    kv2 = jnp.dot(y.astype(jnp.bfloat16), w2,
                  preferred_element_type=jnp.float32) + v_ref[RV_B2:RV_B2 + 1, :]
    att2 = attend(q2.astype(jnp.bfloat16), kv2.astype(jnp.bfloat16),
                  m_cross) + v_ref[RV_O2:RV_O2 + 1, 0:H]
    x = layernorm(x + att2, RV_G2, RV_E2)

    # ---- x = norm3(x + ffn(x))  (Linear -> ReLU -> Linear, dropout_r = 0) ----
    wf1 = w_ref[RW_F1:RW_F1 + H, 0:FF]                   # (H, FF) bf16
    wf2 = w_ref[RW_F2:RW_F2 + FF, 0:H]                   # (FF, H) bf16
    hmid = jnp.maximum(
        jnp.dot(x.astype(jnp.bfloat16), wf1, preferred_element_type=jnp.float32)
        + v_ref[RV_BF1:RV_BF1 + 1, 0:FF], 0.0)
    ffn = jnp.dot(hmid.astype(jnp.bfloat16), wf2,
                  preferred_element_type=jnp.float32) + v_ref[RV_BF2:RV_BF2 + 1, 0:H]
    x = layernorm(x + ffn, RV_G3, RV_E3)

    o_ref[...] = x.astype(o_ref.dtype)


# ---------------- host-side parameter packing (done once, on constants) ----------------
def pack_params(params):
    (wq1, bq1, wk1, bk1, wv1, bv1, wm1, bm1,
     wq2, bq2, wk2, bk2, wv2, bv2, wm2, bm2,
     wf1, bf1, wf2, bf2,
     g1, be1, g2, be2, g3, be3) = params

    scale = 1.0 / math.sqrt(DH)

    def attn_w(wq, wk, wv, wm):
        # Per-head fold of V through merge:  Wvm_h = Wv[:, h] @ Wm[h, :]
        wvm = jnp.concatenate(
            [wv[:, h * DH:(h + 1) * DH] @ wm[h * DH:(h + 1) * DH, :] for h in range(NH)],
            axis=1)                                               # (H, NH*H)
        w = jnp.concatenate([wvm, wk, wq * scale], axis=1)        # (H, 192): [Wvm|Wk|Wq']
        return jnp.pad(w, ((0, 0), (0, LANES - w.shape[1])))      # (H, 256)

    def attn_b(bq, bk, bv, bm, wm):
        brow = jnp.concatenate(
            [jnp.zeros((1, NH * H), jnp.float32), bk, bq * scale], axis=1)
        brow = jnp.pad(brow, ((0, 0), (0, LANES - brow.shape[1])))
        bout = jnp.pad(bv @ wm + bm, ((0, 0), (0, LANES - H)))    # folded merge bias
        return brow, bout

    w_slab = jnp.concatenate(
        [attn_w(wq1, wk1, wv1, wm1),
         attn_w(wq2, wk2, wv2, wm2),
         jnp.pad(wf1, ((0, 0), (0, LANES - FF))),
         jnp.pad(wf2, ((0, 0), (0, LANES - H)))],
        axis=0).astype(jnp.bfloat16)                              # (160, 256) bf16

    def vrow(v):
        return jnp.pad(v, ((0, 0), (0, LANES - v.shape[1])))

    b1row, b1out = attn_b(bq1, bk1, bv1, bm1, wm1)
    b2row, b2out = attn_b(bq2, bk2, bv2, bm2, wm2)
    v_slab = jnp.concatenate(
        [b1row, b1out, b2row, b2out,
         vrow(bf1), vrow(bf2),
         vrow(g1), vrow(be1), vrow(g2), vrow(be2), vrow(g3), vrow(be3)],
        axis=0).astype(jnp.float32)                               # (12, 256) f32
    return w_slab, v_slab


def build_attn_mask(x_mask, y_mask):
    # Additive f32 slab: 0 where attended, -1e9 where masked (key mask OR cross-batch).
    xm = (x_mask.reshape(B, SX) > 0).reshape(-1)           # (RX,)
    ym = (y_mask.reshape(B, SY) > 0).reshape(-1)           # (RY,)
    q_b = jnp.repeat(jnp.arange(B), SX)                    # (RX,)
    kx_b = jnp.repeat(jnp.arange(B), SX)
    ky_b = jnp.repeat(jnp.arange(B), SY)
    m_self = jnp.where((q_b[:, None] != kx_b[None, :]) | xm[None, :], NEG, 0.0)
    m_cross = jnp.where((q_b[:, None] != ky_b[None, :]) | ym[None, :], NEG, 0.0)
    return jnp.concatenate([m_self, m_cross], axis=1).astype(jnp.float32)  # (RX, RX+RY)


# ---------------- wrapper ----------------
def sga_forward(x, y, x_mask, y_mask, packed):
    w_slab, v_slab = packed
    xf = x.reshape(RX, H)                                  # fold batch into sublanes
    yf = y.reshape(RY, H)
    madd = build_attn_mask(x_mask, y_mask)

    vmem = pl.BlockSpec(memory_space=pltpu.MemorySpace.VMEM)   # whole arrays in VMEM
    out2d = pl.pallas_call(
        sga_kernel,
        out_shape=jax.ShapeDtypeStruct((RX, H), jnp.float32),
        in_specs=[vmem] * 5,
        out_specs=vmem,
    )(xf, yf, madd, w_slab, v_slab)
    return out2d.reshape(B, SX, H)


# ---------------- pure-JAX reference (mirrors the torch forward, unfused params) ----------------
def _mha_ref(q_in, kv_in, mask, wq, bq, wk, bk, wv, bv, wm, bm):
    q = q_in @ wq + bq
    k = kv_in @ wk + bk
    v = kv_in @ wv + bv

    def split(t):
        bb, s, _ = t.shape
        return t.reshape(bb, s, NH, DH).transpose(0, 2, 1, 3)

    qh, kh, vh = split(q), split(k), split(v)
    s = jnp.einsum("bhqd,bhkd->bhqk", qh, kh) / math.sqrt(DH)
    s = jnp.where(mask[:, :, None, :] > 0, -1e9, s)
    p = jax.nn.softmax(s, axis=-1)
    o = jnp.einsum("bhqk,bhkd->bhqd", p, vh)
    o = o.transpose(0, 2, 1, 3).reshape(q_in.shape[0], -1, H)
    return o @ wm + bm


def _ln_ref(x, g, b):
    mean = jnp.mean(x, axis=-1, keepdims=True)
    var = jnp.sum((x - mean) ** 2, axis=-1, keepdims=True) / (H - 1)
    return g * (x - mean) / (jnp.sqrt(var) + EPS) + b


def sga_ref(x, y, xm, ym, params):
    (wq1, bq1, wk1, bk1, wv1, bv1, wm1, bm1,
     wq2, bq2, wk2, bk2, wv2, bv2, wm2, bm2,
     wf1, bf1, wf2, bf2,
     g1, be1, g2, be2, g3, be3) = params
    x = _ln_ref(x + _mha_ref(x, x, xm, wq1, bq1, wk1, bk1, wv1, bv1, wm1, bm1), g1, be1)
    x = _ln_ref(x + _mha_ref(x, y, ym, wq2, bq2, wk2, bk2, wv2, bv2, wm2, bm2), g2, be2)
    ffn = jnp.maximum(x @ wf1 + bf1, 0.0) @ wf2 + bf2
    x = _ln_ref(x + ffn, g3, be3)
    return x


# ---------------- deterministic parameter construction ----------------
def make_params(key):
    keys = jax.random.split(key, 32)
    it = iter(keys)

    def lin(in_d, out_d):
        w = jax.random.normal(next(it), (in_d, out_d), jnp.float32) * 0.05
        b = jax.random.normal(next(it), (1, out_d), jnp.float32) * 0.01
        return w, b

    params = []
    for _ in range(2):                       # mhatt1, mhatt2: q, k, v, merge
        for _ in range(4):
            params.extend(lin(H, H))
    params.extend(lin(H, FF))                # ffn fc
    params.extend(lin(FF, H))                # ffn out
    for _ in range(3):                       # norm1..3: a_2 (ones), b_2 (zeros)
        params.append(jnp.ones((1, H), jnp.float32))
        params.append(jnp.zeros((1, H), jnp.float32))
    return params


if __name__ == "__main__":
    key = jax.random.PRNGKey(0)
    kx, ky, kp = jax.random.split(key, 3)

    x = jax.random.normal(kx, (B, SX, H), jnp.float32)
    y = jax.random.normal(ky, (B, SY, H), jnp.float32)
    # mask out the last 2 x-tokens and last 3 y-tokens (value > 0 == masked)
    x_mask = jnp.broadcast_to((jnp.arange(SX) >= SX - 2).astype(jnp.float32)[None, None, :],
                              (B, 1, SX))
    y_mask = jnp.broadcast_to((jnp.arange(SY) >= SY - 3).astype(jnp.float32)[None, None, :],
                              (B, 1, SY))

    params = make_params(kp)
    packed = pack_params(params)

    out = sga_forward(x, y, x_mask, y_mask, packed)
    out = jax.block_until_ready(out)

    ref = sga_ref(x, y, x_mask, y_mask, params)
    assert out.shape == (B, SX, H)
    # Tolerance covers bf16 MXU operands (weights + activation casts), the host-side
    # algebraic folds (Wv@Wm, bv@Wm+bm, scale into Wq) and pl.reciprocal(approx=True);
    # real bugs produce O(0.1+) differences.
    max_diff = jnp.max(jnp.abs(out - ref))
    assert jnp.allclose(out, ref, atol=3e-2, rtol=3e-2), f"max abs diff {max_diff}"

    print("KERNEL_OK")
</pallas_src>

<mosaic_0001>
module attributes {stable_mosaic.version = 11 : i64} {
  func.func @sga_kernel(%arg0: memref<16x32xf32, #tpu.memory_space<vmem>>, %arg1: memref<32x32xf32, #tpu.memory_space<vmem>>, %arg2: memref<16x48xf32, #tpu.memory_space<vmem>>, %arg3: memref<160x256xbf16, #tpu.memory_space<vmem>>, %arg4: memref<12x256xf32, #tpu.memory_space<vmem>>, %arg5: memref<16x32xf32, #tpu.memory_space<vmem>>) attributes {dimension_semantics = [], scalar_prefetch = 0 : i64, scratch_operands = 0 : i64, tpu.core_type = #tpu.core_type<tc>} {
    %c0 = arith.constant 0 : index
    %c0_0 = arith.constant 0 : index
    %0 = vector.load %arg0[%c0, %c0_0] : memref<16x32xf32, #tpu.memory_space<vmem>>, vector<16x32xf32>
    %c0_1 = arith.constant 0 : index
    %c0_2 = arith.constant 0 : index
    %1 = vector.load %arg1[%c0_1, %c0_2] : memref<32x32xf32, #tpu.memory_space<vmem>>, vector<32x32xf32>
    %c0_3 = arith.constant 0 : index
    %c0_4 = arith.constant 0 : index
    %2 = vector.load %arg2[%c0_3, %c0_4] : memref<16x48xf32, #tpu.memory_space<vmem>>, vector<16x16xf32>
    %c0_5 = arith.constant 0 : index
    %c16 = arith.constant 16 : index
    %3 = vector.load %arg2[%c0_5, %c16] : memref<16x48xf32, #tpu.memory_space<vmem>>, vector<16x32xf32>
    %c0_6 = arith.constant 0 : index
    %c0_7 = arith.constant 0 : index
    %4 = vector.load %arg3[%c0_6, %c0_7] : memref<160x256xbf16, #tpu.memory_space<vmem>>, vector<32x256xbf16>
    %5 = arith.truncf %0 : vector<16x32xf32> to vector<16x32xbf16>
    %cst = arith.constant dense<0.000000e+00> : vector<16x256xf32>
    %6 = tpu.matmul %5, %4, %cst {dimension_numbers = #tpu.dot_dimension_numbers<[1], [0], [0], [1], [0, 0, 1, 1], [], []>} : vector<16x32xbf16>, vector<32x256xbf16>, vector<16x256xf32> -> vector<16x256xf32>
    %c0_8 = arith.constant 0 : index
    %c0_9 = arith.constant 0 : index
    %7 = vector.load %arg4[%c0_8, %c0_9] : memref<12x256xf32, #tpu.memory_space<vmem>>, vector<1x256xf32>
    %8 = vector.broadcast %7 : vector<1x256xf32> to vector<16x256xf32>
    %9 = arith.addf %6, %8 : vector<16x256xf32>
    %10 = arith.truncf %9 : vector<16x256xf32> to vector<16x256xbf16>
    %11 = vector.extract_strided_slice %10 {offsets = [0, 160], sizes = [16, 32], strides = [1, 1]} : vector<16x256xbf16> to vector<16x32xbf16>
    %12 = vector.extract_strided_slice %11 {offsets = [0, 0], sizes = [16, 8], strides = [1, 1]} : vector<16x32xbf16> to vector<16x8xbf16>
    %13 = vector.extract_strided_slice %10 {offsets = [0, 128], sizes = [16, 8], strides = [1, 1]} : vector<16x256xbf16> to vector<16x8xbf16>
    %cst_10 = arith.constant dense<0.000000e+00> : vector<16x16xf32>
    %14 = tpu.matmul %12, %13, %cst_10 {dimension_numbers = #tpu.dot_dimension_numbers<[1], [1], [0], [0], [0, 0, 1, 0], [], []>} : vector<16x8xbf16>, vector<16x8xbf16>, vector<16x16xf32> -> vector<16x16xf32>
    %15 = arith.addf %14, %2 : vector<16x16xf32>
    %cst_11 = arith.constant dense<0xFF800000> : vector<16xf32>
    %16 = vector.multi_reduction <maximumf>, %15, %cst_11 [1] : vector<16x16xf32> to vector<16xf32>
    %17 = vector.shape_cast %16 : vector<16xf32> to vector<16x1xf32>
    %18 = vector.broadcast %17 : vector<16x1xf32> to vector<16x16xf32>
    %19 = arith.subf %15, %18 : vector<16x16xf32>
    %20 = math.exp %19 : vector<16x16xf32>
    %cst_12 = arith.constant dense<0.000000e+00> : vector<16xf32>
    %21 = vector.multi_reduction <add>, %20, %cst_12 [1] : vector<16x16xf32> to vector<16xf32>
    %22 = vector.shape_cast %21 : vector<16xf32> to vector<16x1xf32>
    %23 = tpu.reciprocal %22 {approx = true} : vector<16x1xf32> -> vector<16x1xf32>
    %24 = vector.broadcast %23 : vector<16x1xf32> to vector<16x16xf32>
    %25 = arith.mulf %20, %24 : vector<16x16xf32>
    %26 = vector.extract_strided_slice %10 {offsets = [0, 0], sizes = [16, 32], strides = [1, 1]} : vector<16x256xbf16> to vector<16x32xbf16>
    %27 = arith.truncf %25 : vector<16x16xf32> to vector<16x16xbf16>
    %cst_13 = arith.constant dense<0.000000e+00> : vector<16x32xf32>
    %28 = tpu.matmul %27, %26, %cst_13 {dimension_numbers = #tpu.dot_dimension_numbers<[1], [0], [0], [1], [0, 0, 1, 1], [], []>} : vector<16x16xbf16>, vector<16x32xbf16>, vector<16x32xf32> -> vector<16x32xf32>
    %29 = vector.extract_strided_slice %11 {offsets = [0, 8], sizes = [16, 8], strides = [1, 1]} : vector<16x32xbf16> to vector<16x8xbf16>
    %30 = vector.extract_strided_slice %10 {offsets = [0, 136], sizes = [16, 8], strides = [1, 1]} : vector<16x256xbf16> to vector<16x8xbf16>
    %cst_14 = arith.constant dense<0.000000e+00> : vector<16x16xf32>
    %31 = tpu.matmul %29, %30, %cst_14 {dimension_numbers = #tpu.dot_dimension_numbers<[1], [1], [0], [0], [0, 0, 1, 0], [], []>} : vector<16x8xbf16>, vector<16x8xbf16>, vector<16x16xf32> -> vector<16x16xf32>
    %32 = arith.addf %31, %2 : vector<16x16xf32>
    %cst_15 = arith.constant dense<0xFF800000> : vector<16xf32>
    %33 = vector.multi_reduction <maximumf>, %32, %cst_15 [1] : vector<16x16xf32> to vector<16xf32>
    %34 = vector.shape_cast %33 : vector<16xf32> to vector<16x1xf32>
    %35 = vector.broadcast %34 : vector<16x1xf32> to vector<16x16xf32>
    %36 = arith.subf %32, %35 : vector<16x16xf32>
    %37 = math.exp %36 : vector<16x16xf32>
    %cst_16 = arith.constant dense<0.000000e+00> : vector<16xf32>
    %38 = vector.multi_reduction <add>, %37, %cst_16 [1] : vector<16x16xf32> to vector<16xf32>
    %39 = vector.shape_cast %38 : vector<16xf32> to vector<16x1xf32>
    %40 = tpu.reciprocal %39 {approx = true} : vector<16x1xf32> -> vector<16x1xf32>
    %41 = vector.broadcast %40 : vector<16x1xf32> to vector<16x16xf32>
    %42 = arith.mulf %37, %41 : vector<16x16xf32>
    %43 = vector.extract_strided_slice %10 {offsets = [0, 32], sizes = [16, 32], strides = [1, 1]} : vector<16x256xbf16> to vector<16x32xbf16>
    %44 = arith.truncf %42 : vector<16x16xf32> to vector<16x16xbf16>
    %cst_17 = arith.constant dense<0.000000e+00> : vector<16x32xf32>
    %45 = tpu.matmul %44, %43, %cst_17 {dimension_numbers = #tpu.dot_dimension_numbers<[1], [0], [0], [1], [0, 0, 1, 1], [], []>} : vector<16x16xbf16>, vector<16x32xbf16>, vector<16x32xf32> -> vector<16x32xf32>
    %46 = arith.addf %28, %45 : vector<16x32xf32>
    %47 = vector.extract_strided_slice %11 {offsets = [0, 16], sizes = [16, 8], strides = [1, 1]} : vector<16x32xbf16> to vector<16x8xbf16>
    %48 = vector.extract_strided_slice %10 {offsets = [0, 144], sizes = [16, 8], strides = [1, 1]} : vector<16x256xbf16> to vector<16x8xbf16>
    %cst_18 = arith.constant dense<0.000000e+00> : vector<16x16xf32>
    %49 = tpu.matmul %47, %48, %cst_18 {dimension_numbers = #tpu.dot_dimension_numbers<[1], [1], [0], [0], [0, 0, 1, 0], [], []>} : vector<16x8xbf16>, vector<16x8xbf16>, vector<16x16xf32> -> vector<16x16xf32>
    %50 = arith.addf %49, %2 : vector<16x16xf32>
    %cst_19 = arith.constant dense<0xFF800000> : vector<16xf32>
    %51 = vector.multi_reduction <maximumf>, %50, %cst_19 [1] : vector<16x16xf32> to vector<16xf32>
    %52 = vector.shape_cast %51 : vector<16xf32> to vector<16x1xf32>
    %53 = vector.broadcast %52 : vector<16x1xf32> to vector<16x16xf32>
    %54 = arith.subf %50, %53 : vector<16x16xf32>
    %55 = math.exp %54 : vector<16x16xf32>
    %cst_20 = arith.constant dense<0.000000e+00> : vector<16xf32>
    %56 = vector.multi_reduction <add>, %55, %cst_20 [1] : vector<16x16xf32> to vector<16xf32>
    %57 = vector.shape_cast %56 : vector<16xf32> to vector<16x1xf32>
    %58 = tpu.reciprocal %57 {approx = true} : vector<16x1xf32> -> vector<16x1xf32>
    %59 = vector.broadcast %58 : vector<16x1xf32> to vector<16x16xf32>
    %60 = arith.mulf %55, %59 : vector<16x16xf32>
    %61 = vector.extract_strided_slice %10 {offsets = [0, 64], sizes = [16, 32], strides = [1, 1]} : vector<16x256xbf16> to vector<16x32xbf16>
    %62 = arith.truncf %60 : vector<16x16xf32> to vector<16x16xbf16>
    %cst_21 = arith.constant dense<0.000000e+00> : vector<16x32xf32>
    %63 = tpu.matmul %62, %61, %cst_21 {dimension_numbers = #tpu.dot_dimension_numbers<[1], [0], [0], [1], [0, 0, 1, 1], [], []>} : vector<16x16xbf16>, vector<16x32xbf16>, vector<16x32xf32> -> vector<16x32xf32>
    %64 = arith.addf %46, %63 : vector<16x32xf32>
    %65 = vector.extract_strided_slice %11 {offsets = [0, 24], sizes = [16, 8], strides = [1, 1]} : vector<16x32xbf16> to vector<16x8xbf16>
    %66 = vector.extract_strided_slice %10 {offsets = [0, 152], sizes = [16, 8], strides = [1, 1]} : vector<16x256xbf16> to vector<16x8xbf16>
    %cst_22 = arith.constant dense<0.000000e+00> : vector<16x16xf32>
    %67 = tpu.matmul %65, %66, %cst_22 {dimension_numbers = #tpu.dot_dimension_numbers<[1], [1], [0], [0], [0, 0, 1, 0], [], []>} : vector<16x8xbf16>, vector<16x8xbf16>, vector<16x16xf32> -> vector<16x16xf32>
    %68 = arith.addf %67, %2 : vector<16x16xf32>
    %cst_23 = arith.constant dense<0xFF800000> : vector<16xf32>
    %69 = vector.multi_reduction <maximumf>, %68, %cst_23 [1] : vector<16x16xf32> to vector<16xf32>
    %70 = vector.shape_cast %69 : vector<16xf32> to vector<16x1xf32>
    %71 = vector.broadcast %70 : vector<16x1xf32> to vector<16x16xf32>
    %72 = arith.subf %68, %71 : vector<16x16xf32>
    %73 = math.exp %72 : vector<16x16xf32>
    %cst_24 = arith.constant dense<0.000000e+00> : vector<16xf32>
    %74 = vector.multi_reduction <add>, %73, %cst_24 [1] : vector<16x16xf32> to vector<16xf32>
    %75 = vector.shape_cast %74 : vector<16xf32> to vector<16x1xf32>
    %76 = tpu.reciprocal %75 {approx = true} : vector<16x1xf32> -> vector<16x1xf32>
    %77 = vector.broadcast %76 : vector<16x1xf32> to vector<16x16xf32>
    %78 = arith.mulf %73, %77 : vector<16x16xf32>
    %79 = vector.extract_strided_slice %10 {offsets = [0, 96], sizes = [16, 32], strides = [1, 1]} : vector<16x256xbf16> to vector<16x32xbf16>
    %80 = arith.truncf %78 : vector<16x16xf32> to vector<16x16xbf16>
    %cst_25 = arith.constant dense<0.000000e+00> : vector<16x32xf32>
    %81 = tpu.matmul %80, %79, %cst_25 {dimension_numbers = #tpu.dot_dimension_numbers<[1], [0], [0], [1], [0, 0, 1, 1], [], []>} : vector<16x16xbf16>, vector<16x32xbf16>, vector<16x32xf32> -> vector<16x32xf32>
    %82 = arith.addf %64, %81 : vector<16x32xf32>
    %c1 = arith.constant 1 : index
    %c0_26 = arith.constant 0 : index
    %83 = vector.load %arg4[%c1, %c0_26] : memref<12x256xf32, #tpu.memory_space<vmem>>, vector<1x32xf32>
    %84 = vector.broadcast %83 : vector<1x32xf32> to vector<16x32xf32>
    %85 = arith.addf %82, %84 : vector<16x32xf32>
    %86 = arith.addf %0, %85 : vector<16x32xf32>
    %c6 = arith.constant 6 : index
    %c0_27 = arith.constant 0 : index
    %87 = vector.load %arg4[%c6, %c0_27] : memref<12x256xf32, #tpu.memory_space<vmem>>, vector<1x32xf32>
    %c7 = arith.constant 7 : index
    %c0_28 = arith.constant 0 : index
    %88 = vector.load %arg4[%c7, %c0_28] : memref<12x256xf32, #tpu.memory_space<vmem>>, vector<1x32xf32>
    %cst_29 = arith.constant dense<0.000000e+00> : vector<16xf32>
    %89 = vector.multi_reduction <add>, %86, %cst_29 [1] : vector<16x32xf32> to vector<16xf32>
    %90 = vector.shape_cast %89 : vector<16xf32> to vector<16x1xf32>
    %cst_30 = arith.constant 3.200000e+01 : f32
    %91 = vector.broadcast %cst_30 : f32 to vector<16x1xf32>
    %92 = arith.divf %90, %91 : vector<16x1xf32>
    %93 = vector.broadcast %92 : vector<16x1xf32> to vector<16x32xf32>
    %94 = arith.subf %86, %93 : vector<16x32xf32>
    %95 = arith.mulf %94, %94 : vector<16x32xf32>
    %cst_31 = arith.constant dense<0.000000e+00> : vector<16xf32>
    %96 = vector.multi_reduction <add>, %95, %cst_31 [1] : vector<16x32xf32> to vector<16xf32>
    %97 = vector.shape_cast %96 : vector<16xf32> to vector<16x1xf32>
    %cst_32 = arith.constant 0.0322580636 : f32
    %98 = vector.broadcast %cst_32 : f32 to vector<16x1xf32>
    %99 = arith.mulf %97, %98 : vector<16x1xf32>
    %100 = math.sqrt %99 : vector<16x1xf32>
    %cst_33 = arith.constant 9.99999997E-7 : f32
    %101 = vector.broadcast %cst_33 : f32 to vector<16x1xf32>
    %102 = arith.addf %100, %101 : vector<16x1xf32>
    %103 = tpu.reciprocal %102 {approx = true} : vector<16x1xf32> -> vector<16x1xf32>
    %104 = vector.broadcast %103 : vector<16x1xf32> to vector<16x32xf32>
    %105 = arith.mulf %94, %104 : vector<16x32xf32>
    %106 = vector.broadcast %87 : vector<1x32xf32> to vector<16x32xf32>
    %107 = arith.mulf %106, %105 : vector<16x32xf32>
    %108 = vector.broadcast %88 : vector<1x32xf32> to vector<16x32xf32>
    %109 = arith.addf %107, %108 : vector<16x32xf32>
    %c32 = arith.constant 32 : index
    %c0_34 = arith.constant 0 : index
    %110 = vector.load %arg3[%c32, %c0_34] : memref<160x256xbf16, #tpu.memory_space<vmem>>, vector<32x256xbf16>
    %111 = arith.truncf %109 : vector<16x32xf32> to vector<16x32xbf16>
    %112 = vector.extract_strided_slice %110 {offsets = [0, 160], sizes = [32, 32], strides = [1, 1]} : vector<32x256xbf16> to vector<32x32xbf16>
    %cst_35 = arith.constant dense<0.000000e+00> : vector<16x32xf32>
    %113 = tpu.matmul %111, %112, %cst_35 {dimension_numbers = #tpu.dot_dimension_numbers<[1], [0], [0], [1], [0, 0, 1, 1], [], []>} : vector<16x32xbf16>, vector<32x32xbf16>, vector<16x32xf32> -> vector<16x32xf32>
    %c2 = arith.constant 2 : index
    %c160 = arith.constant 160 : index
    %114 = vector.load %arg4[%c2, %c160] : memref<12x256xf32, #tpu.memory_space<vmem>>, vector<1x32xf32>
    %115 = vector.broadcast %114 : vector<1x32xf32> to vector<16x32xf32>
    %116 = arith.addf %113, %115 : vector<16x32xf32>
    %117 = arith.truncf %1 : vector<32x32xf32> to vector<32x32xbf16>
    %cst_36 = arith.constant dense<0.000000e+00> : vector<32x256xf32>
    %118 = tpu.matmul %117, %110, %cst_36 {dimension_numbers = #tpu.dot_dimension_numbers<[1], [0], [0], [1], [0, 0, 1, 1], [], []>} : vector<32x32xbf16>, vector<32x256xbf16>, vector<32x256xf32> -> vector<32x256xf32>
    %c2_37 = arith.constant 2 : index
    %c0_38 = arith.constant 0 : index
    %119 = vector.load %arg4[%c2_37, %c0_38] : memref<12x256xf32, #tpu.memory_space<vmem>>, vector<1x256xf32>
    %120 = vector.broadcast %119 : vector<1x256xf32> to vector<32x256xf32>
    %121 = arith.addf %118, %120 : vector<32x256xf32>
    %122 = arith.truncf %116 : vector<16x32xf32> to vector<16x32xbf16>
    %123 = arith.truncf %121 : vector<32x256xf32> to vector<32x256xbf16>
    %124 = vector.extract_strided_slice %122 {offsets = [0, 0], sizes = [16, 8], strides = [1, 1]} : vector<16x32xbf16> to vector<16x8xbf16>
    %125 = vector.extract_strided_slice %123 {offsets = [0, 128], sizes = [32, 8], strides = [1, 1]} : vector<32x256xbf16> to vector<32x8xbf16>
    %cst_39 = arith.constant dense<0.000000e+00> : vector<16x32xf32>
    %126 = tpu.matmul %124, %125, %cst_39 {dimension_numbers = #tpu.dot_dimension_numbers<[1], [1], [0], [0], [0, 0, 1, 0], [], []>} : vector<16x8xbf16>, vector<32x8xbf16>, vector<16x32xf32> -> vector<16x32xf32>
    %127 = arith.addf %126, %3 : vector<16x32xf32>
    %cst_40 = arith.constant dense<0xFF800000> : vector<16xf32>
    %128 = vector.multi_reduction <maximumf>, %127, %cst_40 [1] : vector<16x32xf32> to vector<16xf32>
    %129 = vector.shape_cast %128 : vector<16xf32> to vector<16x1xf32>
    %130 = vector.broadcast %129 : vector<16x1xf32> to vector<16x32xf32>
    %131 = arith.subf %127, %130 : vector<16x32xf32>
    %132 = math.exp %131 : vector<16x32xf32>
    %cst_41 = arith.constant dense<0.000000e+00> : vector<16xf32>
    %133 = vector.multi_reduction <add>, %132, %cst_41 [1] : vector<16x32xf32> to vector<16xf32>
    %134 = vector.shape_cast %133 : vector<16xf32> to vector<16x1xf32>
    %135 = tpu.reciprocal %134 {approx = true} : vector<16x1xf32> -> vector<16x1xf32>
    %136 = vector.broadcast %135 : vector<16x1xf32> to vector<16x32xf32>
    %137 = arith.mulf %132, %136 : vector<16x32xf32>
    %138 = vector.extract_strided_slice %123 {offsets = [0, 0], sizes = [32, 32], strides = [1, 1]} : vector<32x256xbf16> to vector<32x32xbf16>
    %139 = arith.truncf %137 : vector<16x32xf32> to vector<16x32xbf16>
    %cst_42 = arith.constant dense<0.000000e+00> : vector<16x32xf32>
    %140 = tpu.matmul %139, %138, %cst_42 {dimension_numbers = #tpu.dot_dimension_numbers<[1], [0], [0], [1], [0, 0, 1, 1], [], []>} : vector<16x32xbf16>, vector<32x32xbf16>, vector<16x32xf32> -> vector<16x32xf32>
    %141 = vector.extract_strided_slice %122 {offsets = [0, 8], sizes = [16, 8], strides = [1, 1]} : vector<16x32xbf16> to vector<16x8xbf16>
    %142 = vector.extract_strided_slice %123 {offsets = [0, 136], sizes = [32, 8], strides = [1, 1]} : vector<32x256xbf16> to vector<32x8xbf16>
    %cst_43 = arith.constant dense<0.000000e+00> : vector<16x32xf32>
    %143 = tpu.matmul %141, %142, %cst_43 {dimension_numbers = #tpu.dot_dimension_numbers<[1], [1], [0], [0], [0, 0, 1, 0], [], []>} : vector<16x8xbf16>, vector<32x8xbf16>, vector<16x32xf32> -> vector<16x32xf32>
    %144 = arith.addf %143, %3 : vector<16x32xf32>
    %cst_44 = arith.constant dense<0xFF800000> : vector<16xf32>
    %145 = vector.multi_reduction <maximumf>, %144, %cst_44 [1] : vector<16x32xf32> to vector<16xf32>
    %146 = vector.shape_cast %145 : vector<16xf32> to vector<16x1xf32>
    %147 = vector.broadcast %146 : vector<16x1xf32> to vector<16x32xf32>
    %148 = arith.subf %144, %147 : vector<16x32xf32>
    %149 = math.exp %148 : vector<16x32xf32>
    %cst_45 = arith.constant dense<0.000000e+00> : vector<16xf32>
    %150 = vector.multi_reduction <add>, %149, %cst_45 [1] : vector<16x32xf32> to vector<16xf32>
    %151 = vector.shape_cast %150 : vector<16xf32> to vector<16x1xf32>
    %152 = tpu.reciprocal %151 {approx = true} : vector<16x1xf32> -> vector<16x1xf32>
    %153 = vector.broadcast %152 : vector<16x1xf32> to vector<16x32xf32>
    %154 = arith.mulf %149, %153 : vector<16x32xf32>
    %155 = vector.extract_strided_slice %123 {offsets = [0, 32], sizes = [32, 32], strides = [1, 1]} : vector<32x256xbf16> to vector<32x32xbf16>
    %156 = arith.truncf %154 : vector<16x32xf32> to vector<16x32xbf16>
    %cst_46 = arith.constant dense<0.000000e+00> : vector<16x32xf32>
    %157 = tpu.matmul %156, %155, %cst_46 {dimension_numbers = #tpu.dot_dimension_numbers<[1], [0], [0], [1], [0, 0, 1, 1], [], []>} : vector<16x32xbf16>, vector<32x32xbf16>, vector<16x32xf32> -> vector<16x32xf32>
    %158 = arith.addf %140, %157 : vector<16x32xf32>
    %159 = vector.extract_strided_slice %122 {offsets = [0, 16], sizes = [16, 8], strides = [1, 1]} : vector<16x32xbf16> to vector<16x8xbf16>
    %160 = vector.extract_strided_slice %123 {offsets = [0, 144], sizes = [32, 8], strides = [1, 1]} : vector<32x256xbf16> to vector<32x8xbf16>
    %cst_47 = arith.constant dense<0.000000e+00> : vector<16x32xf32>
    %161 = tpu.matmul %159, %160, %cst_47 {dimension_numbers = #tpu.dot_dimension_numbers<[1], [1], [0], [0], [0, 0, 1, 0], [], []>} : vector<16x8xbf16>, vector<32x8xbf16>, vector<16x32xf32> -> vector<16x32xf32>
    %162 = arith.addf %161, %3 : vector<16x32xf32>
    %cst_48 = arith.constant dense<0xFF800000> : vector<16xf32>
    %163 = vector.multi_reduction <maximumf>, %162, %cst_48 [1] : vector<16x32xf32> to vector<16xf32>
    %164 = vector.shape_cast %163 : vector<16xf32> to vector<16x1xf32>
    %165 = vector.broadcast %164 : vector<16x1xf32> to vector<16x32xf32>
    %166 = arith.subf %162, %165 : vector<16x32xf32>
    %167 = math.exp %166 : vector<16x32xf32>
    %cst_49 = arith.constant dense<0.000000e+00> : vector<16xf32>
    %168 = vector.multi_reduction <add>, %167, %cst_49 [1] : vector<16x32xf32> to vector<16xf32>
    %169 = vector.shape_cast %168 : vector<16xf32> to vector<16x1xf32>
    %170 = tpu.reciprocal %169 {approx = true} : vector<16x1xf32> -> vector<16x1xf32>
    %171 = vector.broadcast %170 : vector<16x1xf32> to vector<16x32xf32>
    %172 = arith.mulf %167, %171 : vector<16x32xf32>
    %173 = vector.extract_strided_slice %123 {offsets = [0, 64], sizes = [32, 32], strides = [1, 1]} : vector<32x256xbf16> to vector<32x32xbf16>
    %174 = arith.truncf %172 : vector<16x32xf32> to vector<16x32xbf16>
    %cst_50 = arith.constant dense<0.000000e+00> : vector<16x32xf32>
    %175 = tpu.matmul %174, %173, %cst_50 {dimension_numbers = #tpu.dot_dimension_numbers<[1], [0], [0], [1], [0, 0, 1, 1], [], []>} : vector<16x32xbf16>, vector<32x32xbf16>, vector<16x32xf32> -> vector<16x32xf32>
    %176 = arith.addf %158, %175 : vector<16x32xf32>
    %177 = vector.extract_strided_slice %122 {offsets = [0, 24], sizes = [16, 8], strides = [1, 1]} : vector<16x32xbf16> to vector<16x8xbf16>
    %178 = vector.extract_strided_slice %123 {offsets = [0, 152], sizes = [32, 8], strides = [1, 1]} : vector<32x256xbf16> to vector<32x8xbf16>
    %cst_51 = arith.constant dense<0.000000e+00> : vector<16x32xf32>
    %179 = tpu.matmul %177, %178, %cst_51 {dimension_numbers = #tpu.dot_dimension_numbers<[1], [1], [0], [0], [0, 0, 1, 0], [], []>} : vector<16x8xbf16>, vector<32x8xbf16>, vector<16x32xf32> -> vector<16x32xf32>
    %180 = arith.addf %179, %3 : vector<16x32xf32>
    %cst_52 = arith.constant dense<0xFF800000> : vector<16xf32>
    %181 = vector.multi_reduction <maximumf>, %180, %cst_52 [1] : vector<16x32xf32> to vector<16xf32>
    %182 = vector.shape_cast %181 : vector<16xf32> to vector<16x1xf32>
    %183 = vector.broadcast %182 : vector<16x1xf32> to vector<16x32xf32>
    %184 = arith.subf %180, %183 : vector<16x32xf32>
    %185 = math.exp %184 : vector<16x32xf32>
    %cst_53 = arith.constant dense<0.000000e+00> : vector<16xf32>
    %186 = vector.multi_reduction <add>, %185, %cst_53 [1] : vector<16x32xf32> to vector<16xf32>
    %187 = vector.shape_cast %186 : vector<16xf32> to vector<16x1xf32>
    %188 = tpu.reciprocal %187 {approx = true} : vector<16x1xf32> -> vector<16x1xf32>
    %189 = vector.broadcast %188 : vector<16x1xf32> to vector<16x32xf32>
    %190 = arith.mulf %185, %189 : vector<16x32xf32>
    %191 = vector.extract_strided_slice %123 {offsets = [0, 96], sizes = [32, 32], strides = [1, 1]} : vector<32x256xbf16> to vector<32x32xbf16>
    %192 = arith.truncf %190 : vector<16x32xf32> to vector<16x32xbf16>
    %cst_54 = arith.constant dense<0.000000e+00> : vector<16x32xf32>
    %193 = tpu.matmul %192, %191, %cst_54 {dimension_numbers = #tpu.dot_dimension_numbers<[1], [0], [0], [1], [0, 0, 1, 1], [], []>} : vector<16x32xbf16>, vector<32x32xbf16>, vector<16x32xf32> -> vector<16x32xf32>
    %194 = arith.addf %176, %193 : vector<16x32xf32>
    %c3 = arith.constant 3 : index
    %c0_55 = arith.constant 0 : index
    %195 = vector.load %arg4[%c3, %c0_55] : memref<12x256xf32, #tpu.memory_space<vmem>>, vector<1x32xf32>
    %196 = vector.broadcast %195 : vector<1x32xf32> to vector<16x32xf32>
    %197 = arith.addf %194, %196 : vector<16x32xf32>
    %198 = arith.addf %109, %197 : vector<16x32xf32>
    %c8 = arith.constant 8 : index
    %c0_56 = arith.constant 0 : index
    %199 = vector.load %arg4[%c8, %c0_56] : memref<12x256xf32, #tpu.memory_space<vmem>>, vector<1x32xf32>
    %c9 = arith.constant 9 : index
    %c0_57 = arith.constant 0 : index
    %200 = vector.load %arg4[%c9, %c0_57] : memref<12x256xf32, #tpu.memory_space<vmem>>, vector<1x32xf32>
    %cst_58 = arith.constant dense<0.000000e+00> : vector<16xf32>
    %201 = vector.multi_reduction <add>, %198, %cst_58 [1] : vector<16x32xf32> to vector<16xf32>
    %202 = vector.shape_cast %201 : vector<16xf32> to vector<16x1xf32>
    %cst_59 = arith.constant 3.200000e+01 : f32
    %203 = vector.broadcast %cst_59 : f32 to vector<16x1xf32>
    %204 = arith.divf %202, %203 : vector<16x1xf32>
    %205 = vector.broadcast %204 : vector<16x1xf32> to vector<16x32xf32>
    %206 = arith.subf %198, %205 : vector<16x32xf32>
    %207 = arith.mulf %206, %206 : vector<16x32xf32>
    %cst_60 = arith.constant dense<0.000000e+00> : vector<16xf32>
    %208 = vector.multi_reduction <add>, %207, %cst_60 [1] : vector<16x32xf32> to vector<16xf32>
    %209 = vector.shape_cast %208 : vector<16xf32> to vector<16x1xf32>
    %cst_61 = arith.constant 0.0322580636 : f32
    %210 = vector.broadcast %cst_61 : f32 to vector<16x1xf32>
    %211 = arith.mulf %209, %210 : vector<16x1xf32>
    %212 = math.sqrt %211 : vector<16x1xf32>
    %cst_62 = arith.constant 9.99999997E-7 : f32
    %213 = vector.broadcast %cst_62 : f32 to vector<16x1xf32>
    %214 = arith.addf %212, %213 : vector<16x1xf32>
    %215 = tpu.reciprocal %214 {approx = true} : vector<16x1xf32> -> vector<16x1xf32>
    %216 = vector.broadcast %215 : vector<16x1xf32> to vector<16x32xf32>
    %217 = arith.mulf %206, %216 : vector<16x32xf32>
    %218 = vector.broadcast %199 : vector<1x32xf32> to vector<16x32xf32>
    %219 = arith.mulf %218, %217 : vector<16x32xf32>
    %220 = vector.broadcast %200 : vector<1x32xf32> to vector<16x32xf32>
    %221 = arith.addf %219, %220 : vector<16x32xf32>
    %c64 = arith.constant 64 : index
    %c0_63 = arith.constant 0 : index
    %222 = vector.load %arg3[%c64, %c0_63] : memref<160x256xbf16, #tpu.memory_space<vmem>>, vector<32x64xbf16>
    %c96 = arith.constant 96 : index
    %c0_64 = arith.constant 0 : index
    %223 = vector.load %arg3[%c96, %c0_64] : memref<160x256xbf16, #tpu.memory_space<vmem>>, vector<64x32xbf16>
    %224 = arith.truncf %221 : vector<16x32xf32> to vector<16x32xbf16>
    %cst_65 = arith.constant dense<0.000000e+00> : vector<16x64xf32>
    %225 = tpu.matmul %224, %222, %cst_65 {dimension_numbers = #tpu.dot_dimension_numbers<[1], [0], [0], [1], [0, 0, 1, 1], [], []>} : vector<16x32xbf16>, vector<32x64xbf16>, vector<16x64xf32> -> vector<16x64xf32>
    %c4 = arith.constant 4 : index
    %c0_66 = arith.constant 0 : index
    %226 = vector.load %arg4[%c4, %c0_66] : memref<12x256xf32, #tpu.memory_space<vmem>>, vector<1x64xf32>
    %227 = vector.broadcast %226 : vector<1x64xf32> to vector<16x64xf32>
    %228 = arith.addf %225, %227 : vector<16x64xf32>
    %cst_67 = arith.constant 0.000000e+00 : f32
    %229 = vector.broadcast %cst_67 : f32 to vector<16x64xf32>
    %230 = arith.maximumf %228, %229 : vector<16x64xf32>
    %231 = arith.truncf %230 : vector<16x64xf32> to vector<16x64xbf16>
    %cst_68 = arith.constant dense<0.000000e+00> : vector<16x32xf32>
    %232 = tpu.matmul %231, %223, %cst_68 {dimension_numbers = #tpu.dot_dimension_numbers<[1], [0], [0], [1], [0, 0, 1, 1], [], []>} : vector<16x64xbf16>, vector<64x32xbf16>, vector<16x32xf32> -> vector<16x32xf32>
    %c5 = arith.constant 5 : index
    %c0_69 = arith.constant 0 : index
    %233 = vector.load %arg4[%c5, %c0_69] : memref<12x256xf32, #tpu.memory_space<vmem>>, vector<1x32xf32>
    %234 = vector.broadcast %233 : vector<1x32xf32> to vector<16x32xf32>
    %235 = arith.addf %232, %234 : vector<16x32xf32>
    %236 = arith.addf %221, %235 : vector<16x32xf32>
    %c10 = arith.constant 10 : index
    %c0_70 = arith.constant 0 : index
    %237 = vector.load %arg4[%c10, %c0_70] : memref<12x256xf32, #tpu.memory_space<vmem>>, vector<1x32xf32>
    %c11 = arith.constant 11 : index
    %c0_71 = arith.constant 0 : index
    %238 = vector.load %arg4[%c11, %c0_71] : memref<12x256xf32, #tpu.memory_space<vmem>>, vector<1x32xf32>
    %cst_72 = arith.constant dense<0.000000e+00> : vector<16xf32>
    %239 = vector.multi_reduction <add>, %236, %cst_72 [1] : vector<16x32xf32> to vector<16xf32>
    %240 = vector.shape_cast %239 : vector<16xf32> to vector<16x1xf32>
    %cst_73 = arith.constant 3.200000e+01 : f32
    %241 = vector.broadcast %cst_73 : f32 to vector<16x1xf32>
    %242 = arith.divf %240, %241 : vector<16x1xf32>
    %243 = vector.broadcast %242 : vector<16x1xf32> to vector<16x32xf32>
    %244 = arith.subf %236, %243 : vector<16x32xf32>
    %245 = arith.mulf %244, %244 : vector<16x32xf32>
    %cst_74 = arith.constant dense<0.000000e+00> : vector<16xf32>
    %246 = vector.multi_reduction <add>, %245, %cst_74 [1] : vector<16x32xf32> to vector<16xf32>
    %247 = vector.shape_cast %246 : vector<16xf32> to vector<16x1xf32>
    %cst_75 = arith.constant 0.0322580636 : f32
    %248 = vector.broadcast %cst_75 : f32 to vector<16x1xf32>
    %249 = arith.mulf %247, %248 : vector<16x1xf32>
    %250 = math.sqrt %249 : vector<16x1xf32>
    %cst_76 = arith.constant 9.99999997E-7 : f32
    %251 = vector.broadcast %cst_76 : f32 to vector<16x1xf32>
    %252 = arith.addf %250, %251 : vector<16x1xf32>
    %253 = tpu.reciprocal %252 {approx = true} : vector<16x1xf32> -> vector<16x1xf32>
    %254 = vector.broadcast %253 : vector<16x1xf32> to vector<16x32xf32>
    %255 = arith.mulf %244, %254 : vector<16x32xf32>
    %256 = vector.broadcast %237 : vector<1x32xf32> to vector<16x32xf32>
    %257 = arith.mulf %256, %255 : vector<16x32xf32>
    %258 = vector.broadcast %238 : vector<1x32xf32> to vector<16x32xf32>
    %259 = arith.addf %257, %258 : vector<16x32xf32>
    %c0_77 = arith.constant 0 : index
    %c0_78 = arith.constant 0 : index
    %260 = vector.load %arg5[%c0_77, %c0_78] : memref<16x32xf32, #tpu.memory_space<vmem>>, vector<16x32xf32>
    tpu.vector_store %arg5[%c0_77, %c0_78], %259 {strides = array<i32>} : memref<16x32xf32, #tpu.memory_space<vmem>>, vector<16x32xf32>,
    return
  }
}

</mosaic_0001>

<llo_original>
// kernel: tpu_custom_call.1
$region0: #{tpu_custom_call.1}
  #allocation0 [shape = 'u32[]', space=smem, size = 0x4, offset = 0x4, fixed_abs, tag = 'smem constant byte address 0x4 - core index']
  #allocation1 [shape = 'u32[144,128]{1,0:T(1,128)}', space=vmem, size = 0x12000, scoped, tag = 'internal scratch']
  %s0 = inlined_call_operand.hbm [shape: f32[16,32], index: 0, kind: input, shape index: {}]
  %s1 = inlined_call_operand.hbm [shape: f32[32,32], index: 1, kind: input, shape index: {}]
  %s2 = inlined_call_operand.hbm [shape: f32[16,48], index: 2, kind: input, shape index: {}]
  %s3 = inlined_call_operand.hbm [shape: bf16[160,256], index: 3, kind: input, shape index: {}]
  %s4 = inlined_call_operand.hbm [shape: f32[12,256], index: 4, kind: input, shape index: {}]
  %s5 = inlined_call_operand.hbm [shape: f32[16,32], index: 5, kind: output, shape index: {}]
  %s6 = sld [smem:[#allocation0]]
  $region50: #{tpu_custom_call.1} parent=0
    _
  %s8 = ssub.s32 1, %s6
  %s9 = scalar_select 0, %s8, %s6
  $region1: #{tpu_custom_call.1} parent=0
    #allocation2 [shape = 'u8[8192]{0}', space=vmem, size = 0x2000, scoped, tag = 'input window, operand 0, single buffered']
    #allocation3 [shape = 's32[1]{0}', space=sflag, size = 0x4, scoped, tag = 'scoped memory for tpu_custom_call.1']
    #allocation4 [shape = 's32[1]{0}', space=sflag, size = 0x4, scoped, tag = 'scoped memory for tpu_custom_call.1']
    #allocation5 [shape = 'u8[16384]{0}', space=vmem, size = 0x4000, scoped, tag = 'input window, operand 1, single buffered']
    #allocation6 [shape = 's32[1]{0}', space=sflag, size = 0x4, scoped, tag = 'scoped memory for tpu_custom_call.1']
    #allocation7 [shape = 'u8[8192]{0}', space=vmem, size = 0x2000, scoped, tag = 'input window, operand 2, single buffered']
    #allocation8 [shape = 'u8[81920]{0}', space=vmem, size = 0x14000, scoped, tag = 'input window, operand 3, single buffered']
    #allocation9 [shape = 's32[1]{0}', space=sflag, size = 0x4, scoped, tag = 'scoped memory for tpu_custom_call.1']
    #allocation10 [shape = 'u8[16384]{0}', space=vmem, size = 0x4000, scoped, tag = 'input window, operand 4, single buffered']
    #allocation11 [shape = 'u8[8192]{0}', space=vmem, size = 0x2000, scoped, tag = 'output window, operand 0, single buffered']
    %10 = vsyncpa [#allocation3], 0
    %11 = vsyncpa [#allocation6], 0
    %12 = vsyncpa [#allocation9], 0
    %13 = vsyncpa [#allocation4], 0
    // Predicated region
    $region2: #{tpu_custom_call.1} parent=1 // pred_check
      _
    $region3: #{tpu_custom_call.1} parent=1 // pred_check_branch
      %15 = sbr.rel (0) target = $region5
    $region4: #{tpu_custom_call.1} parent=1 // pred_region
      %s17 = ssub.s32 256, 256
      %18 = vsyncadd [#allocation3], %s17
      %s19 = sshll.u32 [#allocation2], 4
      %s20 = int_to_ptr.vmem [resolvable:$true] %s19
      %25 = dma.hbm_to_vmem [thread:$0]  %s0, 256, %s20, [#allocation3], 128, 128, 8
    $region5: #{tpu_custom_call.1} parent=1 // pred_fallthru
      _
    // Predicated region
    $region6: #{tpu_custom_call.1} parent=1 // pred_check
      _
    $region7: #{tpu_custom_call.1} parent=1 // pred_check_branch
      %27 = sbr.rel (0) target = $region9
    $region8: #{tpu_custom_call.1} parent=1 // pred_region
      %s29 = ssub.s32 512, 512
      %30 = vsyncadd [#allocation6], %s29
      %s31 = sshll.u32 [#allocation5], 4
      %s32 = int_to_ptr.vmem [resolvable:$true] %s31
      %37 = dma.hbm_to_vmem [thread:$0]  %s1, 512, %s32, [#allocation6], 128, 128, 8
    $region9: #{tpu_custom_call.1} parent=1 // pred_fallthru
      _
    // Predicated region
    $region10: #{tpu_custom_call.1} parent=1 // pred_check
      _
    $region11: #{tpu_custom_call.1} parent=1 // pred_check_branch
      %39 = sbr.rel (0) target = $region13
    $region12: #{tpu_custom_call.1} parent=1 // pred_region
      %s41 = ssub.s32 256, 256
      %42 = vsyncadd [#allocation6], %s41
      %s43 = sshll.u32 [#allocation7], 4
      %s44 = int_to_ptr.vmem [resolvable:$true] %s43
      %49 = dma.hbm_to_vmem [thread:$0]  %s2, 256, %s44, [#allocation6], 128, 128, 8
    $region13: #{tpu_custom_call.1} parent=1 // pred_fallthru
      _
    // Predicated region
    $region14: #{tpu_custom_call.1} parent=1 // pred_check
      _
    $region15: #{tpu_custom_call.1} parent=1 // pred_check_branch
      %51 = sbr.rel (0) target = $region17
    $region16: #{tpu_custom_call.1} parent=1 // pred_region
      %s53 = ssub.s32 2560, 2560
      %54 = vsyncadd [#allocation9], %s53
      %s55 = sshll.u32 [#allocation8], 4
      %s56 = int_to_ptr.vmem [resolvable:$true] %s55
      %61 = dma.hbm_to_vmem [thread:$0]  %s3, 2560, %s56, [#allocation9], 128, 128, 8
    $region17: #{tpu_custom_call.1} parent=1 // pred_fallthru
      _
    // Predicated region
    $region18: #{tpu_custom_call.1} parent=1 // pred_check
      _
    $region19: #{tpu_custom_call.1} parent=1 // pred_check_branch
      %63 = sbr.rel (0) target = $region21
    $region20: #{tpu_custom_call.1} parent=1 // pred_region
      %s65 = ssub.s32 512, 512
      %66 = vsyncadd [#allocation9], %s65
      %s67 = sshll.u32 [#allocation10], 4
      %s68 = int_to_ptr.vmem [resolvable:$true] %s67
      %73 = dma.hbm_to_vmem [thread:$0]  %s4, 512, %s68, [#allocation9], 256, 256, 16
    $region21: #{tpu_custom_call.1} parent=1 // pred_fallthru
      _
    // Predicated region
    $region22: #{tpu_custom_call.1} parent=1 // pred_check
      _
    $region23: #{tpu_custom_call.1} parent=1 // pred_check_branch
      %75 = sbr.rel (0) target = $region25
    $region24: #{tpu_custom_call.1} parent=1 // pred_region
      %76 = dma.done [#allocation3], 256
    $region25: #{tpu_custom_call.1} parent=1 // pred_fallthru
      _
    // Predicated region
    $region26: #{tpu_custom_call.1} parent=1 // pred_check
      _
    $region27: #{tpu_custom_call.1} parent=1 // pred_check_branch
      %78 = sbr.rel (0) target = $region29
    $region28: #{tpu_custom_call.1} parent=1 // pred_region
      %79 = dma.done [#allocation6], 512
    $region29: #{tpu_custom_call.1} parent=1 // pred_fallthru
      _
    // Predicated region
    $region30: #{tpu_custom_call.1} parent=1 // pred_check
      _
    $region31: #{tpu_custom_call.1} parent=1 // pred_check_branch
      %81 = sbr.rel (0) target = $region33
    $region32: #{tpu_custom_call.1} parent=1 // pred_region
      %82 = dma.done [#allocation6], 256
    $region33: #{tpu_custom_call.1} parent=1 // pred_fallthru
      _
    // Predicated region
    $region34: #{tpu_custom_call.1} parent=1 // pred_check
      _
    $region35: #{tpu_custom_call.1} parent=1 // pred_check_branch
      %84 = sbr.rel (0) target = $region37
    $region36: #{tpu_custom_call.1} parent=1 // pred_region
      %85 = dma.done [#allocation9], 2560
    $region37: #{tpu_custom_call.1} parent=1 // pred_fallthru
      _
    // Predicated region
    $region38: #{tpu_custom_call.1} parent=1 // pred_check
      _
    $region39: #{tpu_custom_call.1} parent=1 // pred_check_branch
      %87 = sbr.rel (0) target = $region41
    $region40: #{tpu_custom_call.1} parent=1 // pred_region
      %88 = dma.done [#allocation9], 512
    $region41: #{tpu_custom_call.1} parent=1 // pred_fallthru
      _
    %v90 = vld [vmem:[#allocation2] sm:$0xff]
    %v91 = vld [vmem:[#allocation2 + $0x8] sm:$0xff]
    %v92 = vld [vmem:[#allocation5] sm:$0xff]
    %v93 = vld [vmem:[#allocation5 + $0x8] sm:$0xff]
    %v94 = vld [vmem:[#allocation5 + $0x10] sm:$0xff]
    %v95 = vld [vmem:[#allocation5 + $0x18] sm:$0xff]
    %v96 = vld [vmem:[#allocation7] sm:$0xff]
    %v97 = vld [vmem:[#allocation7 + $0x8] sm:$0xff]
    %v98 = vld [vmem:[#allocation8] sm:$0xff]
    %v99 = vld [vmem:[#allocation8 + $0x8] sm:$0xff]
    %v100 = vld [vmem:[#allocation8 + $0x10] sm:$0xff]
    %v101 = vld [vmem:[#allocation8 + $0x18] sm:$0xff]
    %v102 = vpack.c.bf16 %v91, %v90
    %v103 = vld [vmem:[#allocation10] ss:$8 sm:$0x3]
    %v105 = vlaneseq
    %v106 = vshrl.u32 %v105, 7
    %v107 = vsub.s32 0, %v106
    %v108 = vrot.slane %v103, %v107
    %v109 = vlaneseq
    %v110 = vshrl.u32 %v109, 7
    %v111 = vsub.s32 1, %v110
    %v112 = vrot.slane %v103, %v111
    %v119 = vunpack.c.l.b16 %v98
    %v120 = vunpack.c.h.b16 %v98
    %v121 = vunpack.c.l.b16 %v99
    %v122 = vunpack.c.h.b16 %v99
    %v123 = vunpack.c.l.b16 %v100
    %v124 = vunpack.c.h.b16 %v100
    %v125 = vunpack.c.l.b16 %v101
    %v126 = vunpack.c.h.b16 %v101
    %v127 = vpack.c.b16 %v121, %v119
    %v128 = vpack.c.b16 %v122, %v120
    %v129 = vpack.c.b16 %v125, %v123
    %v130 = vpack.c.b16 %v126, %v124
    %vm135 = vcmask 261120
    %v137 = vsel %vm135, %v102, 0
    %139 = vmatprep.subr.bf16.mxu0 %v128
    %140 = vmatpush1.bf16.msra.mxu0 %v127
    %141 = vmatprep.subr.bf16.mxu0 %v130
    %142 = vmatpush1.bf16.msra.mxu0 %v129
    %143 = vmatprep.subr.bf16.mxu0 0
    %144 = vmatpush1.bf16.msra.mxu0 0
    %145 = vmatprep.subr.bf16.mxu0 0
    %146 = vmatpush1.bf16.msra.mxu0 0
    %147 = vmatprep.subr.bf16.mxu0 0
    %148 = vmatpush1.bf16.msra.mxu0 0
    %149 = vmatprep.subr.bf16.mxu0 0
    %150 = vmatpush1.bf16.msra.mxu0 0
    %151 = vmatprep.subr.bf16.mxu0 0
    %152 = vmatpush1.bf16.msra.mxu0 0
    %153 = vmatprep.subr.bf16.mxu0 0
    %154 = vmatpush1.bf16.msra.mxu0 0
    %155 = vmatprep.subr.bf16.mxu0 0
    %156 = vmatpush1.bf16.msra.mxu0 0
    %157 = vmatprep.subr.bf16.mxu0 0
    %158 = vmatpush1.bf16.msra.mxu0 0
    %159 = vmatprep.subr.bf16.mxu0 0
    %160 = vmatpush1.bf16.msra.mxu0 0
    %161 = vmatprep.subr.bf16.mxu0 0
    %162 = vmatpush1.bf16.msra.mxu0 0
    %163 = vmatprep.subr.bf16.mxu0 0
    %164 = vmatpush1.bf16.msra.mxu0 0
    %165 = vmatprep.subr.bf16.mxu0 0
    %166 = vmatpush1.bf16.msra.mxu0 0
    %167 = vmatprep.subr.bf16.mxu0 0
    %168 = vmatpush1.bf16.msra.mxu0 0
    %169 = vmatprep.subr.bf16.mxu0 0
    %170 = vmatpush1.bf16.msra.mxu0 0
    %171 = vmatprep.mubr.bf16.mxu0 0
    %172 = vmatmul.mubr.bf16.gmra.mrb[0].mxu0 %v137
    %v173 = vpop.f32.mrb[0].mxu0
    %v174 = vadd.f32 %v108, %v173
    %v175 = vpop.f32.mrb[0].mxu0
    %v176 = vadd.f32 %v112, %v175
    %v177 = vpop.f32.mrb[0].mxu0
    %v178 = vadd.f32 %v108, %v177
    %v179 = vpop.f32.mrb[0].mxu0
    %v180 = vadd.f32 %v112, %v179
    %181 = vdwg.mxu0
    %v182 = vpack.c.bf16 %v178, %v174
    %v183 = vpack.c.bf16 %v180, %v176
    %185 = vrot.lane.b32.xlu0 %v183, 96
    %v186 = vpop.permute.xlu0 %185
    %vm187 = vcmask 64512
    %v189 = vsel %vm187, %v186, 0
    %v192 = vsel %vm187, %v183, 0
    %194 = vmatprep.subr.bf16.mxu0 0
    %195 = vmatpush1.bf16.xpose.msra.mxu0 %v192
    %196 = vmatprep.subr.bf16.mxu0 0
    %197 = vmatpush1.bf16.xpose.msra.mxu0 0
    %198 = vmatprep.subr.bf16.mxu0 0
    %199 = vmatpush1.bf16.xpose.msra.mxu0 0
    %200 = vmatprep.subr.bf16.mxu0 0
    %201 = vmatpush1.bf16.xpose.msra.mxu0 0
    %202 = vmatprep.subr.bf16.mxu0 0
    %203 = vmatpush1.bf16.xpose.msra.mxu0 0
    %204 = vmatprep.subr.bf16.mxu0 0
    %205 = vmatpush1.bf16.xpose.msra.mxu0 0
    %206 = vmatprep.subr.bf16.mxu0 0
    %207 = vmatpush1.bf16.xpose.msra.mxu0 0
    %208 = vmatprep.subr.bf16.mxu0 0
    %209 = vmatpush1.bf16.xpose.msra.mxu0 0
    %210 = vmatprep.subr.bf16.mxu0 0
    %211 = vmatpush1.bf16.xpose.msra.mxu0 0
    %212 = vmatprep.subr.bf16.mxu0 0
    %213 = vmatpush1.bf16.xpose.msra.mxu0 0
    %214 = vmatprep.subr.bf16.mxu0 0
    %215 = vmatpush1.bf16.xpose.msra.mxu0 0
    %216 = vmatprep.subr.bf16.mxu0 0
    %217 = vmatpush1.bf16.xpose.msra.mxu0 0
    %218 = vmatprep.subr.bf16.mxu0 0
    %219 = vmatpush1.bf16.xpose.msra.mxu0 0
    %220 = vmatprep.subr.bf16.mxu0 0
    %221 = vmatpush1.bf16.xpose.msra.mxu0 0
    %222 = vmatprep.subr.bf16.mxu0 0
    %223 = vmatpush1.bf16.xpose.msra.mxu0 0
    %224 = vmatprep.subr.bf16.mxu0 0
    %225 = vmatpush1.bf16.xpose.msra.mxu0 0
    %226 = vmatprep.mubr.bf16.mxu0 0
    %227 = vmatmul.mubr.bf16.gmra.mrb[0].mxu0 %v189
    %v228 = vpop.f32.mrb[0].mxu0
    %v229 = vadd.f32 %v96, %v228
    %v230 = vpop.f32.mrb[0].mxu0
    %v231 = vpop.f32.mrb[0].mxu0
    %v232 = vadd.f32 %v97, %v231
    %v233 = vpop.f32.mrb[0].mxu0
    %234 = vdwg.mxu0
    %vm235 = vcmask 130048
    %v236 = vsel %vm235, %v229, -inf
    %237 = vmax.xlane.f32.xlu0 %v236
    %v238 = vpop.xlane.xlu0 %237
    %v239 = vsel %vm235, %v232, -inf
    %240 = vmax.xlane.f32.xlu0 %v239
    %v241 = vpop.xlane.xlu0 %240
    %v242 = vsub.f32 %v229, %v238
    %v243 = vsub.f32 %v232, %v241
    %v244 = vmul.f32 %v242, 1.442695
    %v245 = vpow.pop %v244
    %v246 = vmul.f32 %v243, 1.442695
    %v247 = vpow.pop %v246
    %v248 = vsel %vm235, %v245, 0.0
    %249 = vadd.xlane.f32.xlu0 %v248
    %v250 = vpop.xlane.xlu0 %249
    %v251 = vsel %vm235, %v247, 0.0
    %252 = vadd.xlane.f32.xlu0 %v251
    %v253 = vpop.xlane.xlu0 %252
    %v254 = vrcp.pop %v250
    %v255 = vrcp.pop %v253
    %v256 = vmul.f32 %v245, %v254
    %v257 = vmul.f32 %v247, %v255
    %v258 = vpack.c.bf16 %v257, %v256
    %259 = vrot.lane.b32.xlu0 %v183, 88
    %v260 = vpop.permute.xlu0 %259
    %261 = vrot.lane.b32.xlu0 %v183, 120
    %v262 = vpop.permute.xlu0 %261
    %v264 = vsel %vm187, %v260, 0
    %v267 = vsel %vm187, %v262, 0
    %269 = vmatprep.subr.bf16.mxu0 0
    %270 = vmatpush1.bf16.xpose.msra.mxu0 %v267
    %271 = vmatprep.subr.bf16.mxu0 0
    %272 = vmatpush1.bf16.xpose.msra.mxu0 0
    %273 = vmatprep.subr.bf16.mxu0 0
    %274 = vmatpush1.bf16.xpose.msra.mxu0 0
    %275 = vmatprep.subr.bf16.mxu0 0
    %276 = vmatpush1.bf16.xpose.msra.mxu0 0
    %277 = vmatprep.subr.bf16.mxu0 0
    %278 = vmatpush1.bf16.xpose.msra.mxu0 0
    %279 = vmatprep.subr.bf16.mxu0 0
    %280 = vmatpush1.bf16.xpose.msra.mxu0 0
    %281 = vmatprep.subr.bf16.mxu0 0
    %282 = vmatpush1.bf16.xpose.msra.mxu0 0
    %283 = vmatprep.subr.bf16.mxu0 0
    %284 = vmatpush1.bf16.xpose.msra.mxu0 0
    %285 = vmatprep.subr.bf16.mxu0 0
    %286 = vmatpush1.bf16.xpose.msra.mxu0 0
    %287 = vmatprep.subr.bf16.mxu0 0
    %288 = vmatpush1.bf16.xpose.msra.mxu0 0
    %289 = vmatprep.subr.bf16.mxu0 0
    %290 = vmatpush1.bf16.xpose.msra.mxu0 0
    %291 = vmatprep.subr.bf16.mxu0 0
    %292 = vmatpush1.bf16.xpose.msra.mxu0 0
    %293 = vmatprep.subr.bf16.mxu0 0
    %294 = vmatpush1.bf16.xpose.msra.mxu0 0
    %295 = vmatprep.subr.bf16.mxu0 0
    %296 = vmatpush1.bf16.xpose.msra.mxu0 0
    %297 = vmatprep.subr.bf16.mxu0 0
    %298 = vmatpush1.bf16.xpose.msra.mxu0 0
    %299 = vmatprep.subr.bf16.mxu0 0
    %300 = vmatpush1.bf16.xpose.msra.mxu0 0
    %301 = vmatprep.mubr.bf16.mxu0 0
    %302 = vmatmul.mubr.bf16.gmra.mrb[0].mxu0 %v264
    %v303 = vpop.f32.mrb[0].mxu0
    %v304 = vadd.f32 %v96, %v303
    %v305 = vpop.f32.mrb[0].mxu0
    %v306 = vpop.f32.mrb[0].mxu0
    %v307 = vadd.f32 %v97, %v306
    %v308 = vpop.f32.mrb[0].mxu0
    %309 = vdwg.mxu0
    %v310 = vsel %vm235, %v304, -inf
    %311 = vmax.xlane.f32.xlu0 %v310
    %v312 = vpop.xlane.xlu0 %311
    %v313 = vsel %vm235, %v307, -inf
    %314 = vmax.xlane.f32.xlu0 %v313
    %v315 = vpop.xlane.xlu0 %314
    %v316 = vsub.f32 %v304, %v312
    %v317 = vsub.f32 %v307, %v315
    %v318 = vmul.f32 %v316, 1.442695
    %v319 = vpow.pop %v318
    %v320 = vmul.f32 %v317, 1.442695
    %v321 = vpow.pop %v320
    %v322 = vsel %vm235, %v319, 0.0
    %323 = vadd.xlane.f32.xlu0 %v322
    %v324 = vpop.xlane.xlu0 %323
    %v325 = vsel %vm235, %v321, 0.0
    %326 = vadd.xlane.f32.xlu0 %v325
    %v327 = vpop.xlane.xlu0 %326
    %v328 = vrcp.pop %v324
    %v329 = vrcp.pop %v327
    %v330 = vmul.f32 %v319, %v328
    %v331 = vmul.f32 %v321, %v329
    %v332 = vpack.c.bf16 %v331, %v330
    %334 = vrot.lane.b32.xlu0 %v182, 96
    %v335 = vpop.permute.xlu0 %334
    %v338 = vsel %vm235, %v332, 0
    %340 = vmatprep.subr.bf16.mxu0 0
    %341 = vmatpush1.bf16.msra.mxu0 %v335
    %342 = vmatprep.subr.bf16.mxu0 0
    %343 = vmatpush1.bf16.msra.mxu0 0
    %344 = vmatprep.subr.bf16.mxu0 0
    %345 = vmatpush1.bf16.msra.mxu0 0
    %346 = vmatprep.subr.bf16.mxu0 0
    %347 = vmatpush1.bf16.msra.mxu0 0
    %348 = vmatprep.subr.bf16.mxu0 0
    %349 = vmatpush1.bf16.msra.mxu0 0
    %350 = vmatprep.subr.bf16.mxu0 0
    %351 = vmatpush1.bf16.msra.mxu0 0
    %352 = vmatprep.subr.bf16.mxu0 0
    %353 = vmatpush1.bf16.msra.mxu0 0
    %354 = vmatprep.subr.bf16.mxu0 0
    %355 = vmatpush1.bf16.msra.mxu0 0
    %356 = vmatprep.subr.bf16.mxu0 0
    %357 = vmatpush1.bf16.msra.mxu0 0
    %358 = vmatprep.subr.bf16.mxu0 0
    %359 = vmatpush1.bf16.msra.mxu0 0
    %360 = vmatprep.subr.bf16.mxu0 0
    %361 = vmatpush1.bf16.msra.mxu0 0
    %362 = vmatprep.subr.bf16.mxu0 0
    %363 = vmatpush1.bf16.msra.mxu0 0
    %364 = vmatprep.subr.bf16.mxu0 0
    %365 = vmatpush1.bf16.msra.mxu0 0
    %366 = vmatprep.subr.bf16.mxu0 0
    %367 = vmatpush1.bf16.msra.mxu0 0
    %368 = vmatprep.subr.bf16.mxu0 0
    %369 = vmatpush1.bf16.msra.mxu0 0
    %370 = vmatprep.subr.bf16.mxu0 0
    %371 = vmatpush1.bf16.msra.mxu0 0
    %372 = vmatprep.mubr.bf16.mxu0 0
    %373 = vmatmul.mubr.bf16.gmra.mrb[0].mxu0 %v338
    %v374 = vpop.f32.mrb[0].mxu0
    %v375 = vadd.f32 0.0, %v374
    %v376 = vpop.f32.mrb[0].mxu0
    %v377 = vpop.f32.mrb[0].mxu0
    %v378 = vadd.f32 0.0, %v377
    %v379 = vpop.f32.mrb[0].mxu0
    %380 = vdwg.mxu0
    %v382 = vsel %vm235, %v258, 0
    %384 = vmatprep.subr.bf16.mxu0 0
    %385 = vmatpush1.bf16.msra.mxu0 %v182
    %386 = vmatprep.subr.bf16.mxu0 0
    %387 = vmatpush1.bf16.msra.mxu0 0
    %388 = vmatprep.subr.bf16.mxu0 0
    %389 = vmatpush1.bf16.msra.mxu0 0
    %390 = vmatprep.subr.bf16.mxu0 0
    %391 = vmatpush1.bf16.msra.mxu0 0
    %392 = vmatprep.subr.bf16.mxu0 0
    %393 = vmatpush1.bf16.msra.mxu0 0
    %394 = vmatprep.subr.bf16.mxu0 0
    %395 = vmatpush1.bf16.msra.mxu0 0
    %396 = vmatprep.subr.bf16.mxu0 0
    %397 = vmatpush1.bf16.msra.mxu0 0
    %398 = vmatprep.subr.bf16.mxu0 0
    %399 = vmatpush1.bf16.msra.mxu0 0
    %400 = vmatprep.subr.bf16.mxu0 0
    %401 = vmatpush1.bf16.msra.mxu0 0
    %402 = vmatprep.subr.bf16.mxu0 0
    %403 = vmatpush1.bf16.msra.mxu0 0
    %404 = vmatprep.subr.bf16.mxu0 0
    %405 = vmatpush1.bf16.msra.mxu0 0
    %406 = vmatprep.subr.bf16.mxu0 0
    %407 = vmatpush1.bf16.msra.mxu0 0
    %408 = vmatprep.subr.bf16.mxu0 0
    %409 = vmatpush1.bf16.msra.mxu0 0
    %410 = vmatprep.subr.bf16.mxu0 0
    %411 = vmatpush1.bf16.msra.mxu0 0
    %412 = vmatprep.subr.bf16.mxu0 0
    %413 = vmatpush1.bf16.msra.mxu0 0
    %414 = vmatprep.subr.bf16.mxu0 0
    %415 = vmatpush1.bf16.msra.mxu0 0
    %416 = vmatprep.mubr.bf16.mxu0 0
    %417 = vmatmul.mubr.bf16.gmra.mrb[0].mxu0 %v382
    %v418 = vpop.f32.mrb[0].mxu0
    %v419 = vadd.f32 %v375, %v418
    %v420 = vpop.f32.mrb[0].mxu0
    %v421 = vpop.f32.mrb[0].mxu0
    %v422 = vadd.f32 %v378, %v421
    %v423 = vpop.f32.mrb[0].mxu0
    %424 = vdwg.mxu0
    %425 = vrot.lane.b32.xlu0 %v183, 80
    %v426 = vpop.permute.xlu0 %425
    %427 = vrot.lane.b32.xlu0 %v183, 112
    %v428 = vpop.permute.xlu0 %427
    %v430 = vsel %vm187, %v426, 0
    %v433 = vsel %vm187, %v428, 0
    %435 = vmatprep.subr.bf16.mxu0 0
    %436 = vmatpush1.bf16.xpose.msra.mxu0 %v433
    %437 = vmatprep.subr.bf16.mxu0 0
    %438 = vmatpush1.bf16.xpose.msra.mxu0 0
    %439 = vmatprep.subr.bf16.mxu0 0
    %440 = vmatpush1.bf16.xpose.msra.mxu0 0
    %441 = vmatprep.subr.bf16.mxu0 0
    %442 = vmatpush1.bf16.xpose.msra.mxu0 0
    %443 = vmatprep.subr.bf16.mxu0 0
    %444 = vmatpush1.bf16.xpose.msra.mxu0 0
    %445 = vmatprep.subr.bf16.mxu0 0
    %446 = vmatpush1.bf16.xpose.msra.mxu0 0
    %447 = vmatprep.subr.bf16.mxu0 0
    %448 = vmatpush1.bf16.xpose.msra.mxu0 0
    %449 = vmatprep.subr.bf16.mxu0 0
    %450 = vmatpush1.bf16.xpose.msra.mxu0 0
    %451 = vmatprep.subr.bf16.mxu0 0
    %452 = vmatpush1.bf16.xpose.msra.mxu0 0
    %453 = vmatprep.subr.bf16.mxu0 0
    %454 = vmatpush1.bf16.xpose.msra.mxu0 0
    %455 = vmatprep.subr.bf16.mxu0 0
    %456 = vmatpush1.bf16.xpose.msra.mxu0 0
    %457 = vmatprep.subr.bf16.mxu0 0
    %458 = vmatpush1.bf16.xpose.msra.mxu0 0
    %459 = vmatprep.subr.bf16.mxu0 0
    %460 = vmatpush1.bf16.xpose.msra.mxu0 0
    %461 = vmatprep.subr.bf16.mxu0 0
    %462 = vmatpush1.bf16.xpose.msra.mxu0 0
    %463 = vmatprep.subr.bf16.mxu0 0
    %464 = vmatpush1.bf16.xpose.msra.mxu0 0
    %465 = vmatprep.subr.bf16.mxu0 0
    %466 = vmatpush1.bf16.xpose.msra.mxu0 0
    %467 = vmatprep.mubr.bf16.mxu0 0
    %468 = vmatmul.mubr.bf16.gmra.mrb[0].mxu0 %v430
    %v469 = vpop.f32.mrb[0].mxu0
    %v470 = vadd.f32 %v96, %v469
    %v471 = vpop.f32.mrb[0].mxu0
    %v472 = vpop.f32.mrb[0].mxu0
    %v473 = vadd.f32 %v97, %v472
    %v474 = vpop.f32.mrb[0].mxu0
    %475 = vdwg.mxu0
    %v476 = vsel %vm235, %v470, -inf
    %477 = vmax.xlane.f32.xlu0 %v476
    %v478 = vpop.xlane.xlu0 %477
    %v479 = vsel %vm235, %v473, -inf
    %480 = vmax.xlane.f32.xlu0 %v479
    %v481 = vpop.xlane.xlu0 %480
    %v482 = vsub.f32 %v470, %v478
    %v483 = vsub.f32 %v473, %v481
    %v484 = vmul.f32 %v482, 1.442695
    %v485 = vpow.pop %v484
    %v486 = vmul.f32 %v483, 1.442695
    %v487 = vpow.pop %v486
    %v488 = vsel %vm235, %v485, 0.0
    %489 = vadd.xlane.f32.xlu0 %v488
    %v490 = vpop.xlane.xlu0 %489
    %v491 = vsel %vm235, %v487, 0.0
    %492 = vadd.xlane.f32.xlu0 %v491
    %v493 = vpop.xlane.xlu0 %492
    %v494 = vrcp.pop %v490
    %v495 = vrcp.pop %v493
    %v496 = vmul.f32 %v485, %v494
    %v497 = vmul.f32 %v487, %v495
    %v498 = vpack.c.bf16 %v497, %v496
    %499 = vrot.lane.b32.xlu0 %v182, 64
    %v500 = vpop.permute.xlu0 %499
    %v503 = vsel %vm235, %v498, 0
    %505 = vmatprep.subr.bf16.mxu0 0
    %506 = vmatpush1.bf16.msra.mxu0 %v500
    %507 = vmatprep.subr.bf16.mxu0 0
    %508 = vmatpush1.bf16.msra.mxu0 0
    %509 = vmatprep.subr.bf16.mxu0 0
    %510 = vmatpush1.bf16.msra.mxu0 0
    %511 = vmatprep.subr.bf16.mxu0 0
    %512 = vmatpush1.bf16.msra.mxu0 0
    %513 = vmatprep.subr.bf16.mxu0 0
    %514 = vmatpush1.bf16.msra.mxu0 0
    %515 = vmatprep.subr.bf16.mxu0 0
    %516 = vmatpush1.bf16.msra.mxu0 0
    %517 = vmatprep.subr.bf16.mxu0 0
    %518 = vmatpush1.bf16.msra.mxu0 0
    %519 = vmatprep.subr.bf16.mxu0 0
    %520 = vmatpush1.bf16.msra.mxu0 0
    %521 = vmatprep.subr.bf16.mxu0 0
    %522 = vmatpush1.bf16.msra.mxu0 0
    %523 = vmatprep.subr.bf16.mxu0 0
    %524 = vmatpush1.bf16.msra.mxu0 0
    %525 = vmatprep.subr.bf16.mxu0 0
    %526 = vmatpush1.bf16.msra.mxu0 0
    %527 = vmatprep.subr.bf16.mxu0 0
    %528 = vmatpush1.bf16.msra.mxu0 0
    %529 = vmatprep.subr.bf16.mxu0 0
    %530 = vmatpush1.bf16.msra.mxu0 0
    %531 = vmatprep.subr.bf16.mxu0 0
    %532 = vmatpush1.bf16.msra.mxu0 0
    %533 = vmatprep.subr.bf16.mxu0 0
    %534 = vmatpush1.bf16.msra.mxu0 0
    %535 = vmatprep.subr.bf16.mxu0 0
    %536 = vmatpush1.bf16.msra.mxu0 0
    %537 = vmatprep.mubr.bf16.mxu0 0
    %538 = vmatmul.mubr.bf16.gmra.mrb[0].mxu0 %v503
    %v539 = vpop.f32.mrb[0].mxu0
    %v540 = vadd.f32 0.0, %v539
    %v541 = vpop.f32.mrb[0].mxu0
    %v542 = vpop.f32.mrb[0].mxu0
    %v543 = vadd.f32 0.0, %v542
    %v544 = vpop.f32.mrb[0].mxu0
    %545 = vdwg.mxu0
    %v546 = vadd.f32 %v419, %v540
    %v547 = vadd.f32 %v422, %v543
    %548 = vrot.lane.b32.xlu0 %v183, 72
    %v549 = vpop.permute.xlu0 %548
    %550 = vrot.lane.b32.xlu0 %v183, 104
    %v551 = vpop.permute.xlu0 %550
    %v553 = vsel %vm187, %v549, 0
    %v556 = vsel %vm187, %v551, 0
    %558 = vmatprep.subr.bf16.mxu0 0
    %559 = vmatpush1.bf16.xpose.msra.mxu0 %v556
    %560 = vmatprep.subr.bf16.mxu0 0
    %561 = vmatpush1.bf16.xpose.msra.mxu0 0
    %562 = vmatprep.subr.bf16.mxu0 0
    %563 = vmatpush1.bf16.xpose.msra.mxu0 0
    %564 = vmatprep.subr.bf16.mxu0 0
    %565 = vmatpush1.bf16.xpose.msra.mxu0 0
    %566 = vmatprep.subr.bf16.mxu0 0
    %567 = vmatpush1.bf16.xpose.msra.mxu0 0
    %568 = vmatprep.subr.bf16.mxu0 0
    %569 = vmatpush1.bf16.xpose.msra.mxu0 0
    %570 = vmatprep.subr.bf16.mxu0 0
    %571 = vmatpush1.bf16.xpose.msra.mxu0 0
    %572 = vmatprep.subr.bf16.mxu0 0
    %573 = vmatpush1.bf16.xpose.msra.mxu0 0
    %574 = vmatprep.subr.bf16.mxu0 0
    %575 = vmatpush1.bf16.xpose.msra.mxu0 0
    %576 = vmatprep.subr.bf16.mxu0 0
    %577 = vmatpush1.bf16.xpose.msra.mxu0 0
    %578 = vmatprep.subr.bf16.mxu0 0
    %579 = vmatpush1.bf16.xpose.msra.mxu0 0
    %580 = vmatprep.subr.bf16.mxu0 0
    %581 = vmatpush1.bf16.xpose.msra.mxu0 0
    %582 = vmatprep.subr.bf16.mxu0 0
    %583 = vmatpush1.bf16.xpose.msra.mxu0 0
    %584 = vmatprep.subr.bf16.mxu0 0
    %585 = vmatpush1.bf16.xpose.msra.mxu0 0
    %586 = vmatprep.subr.bf16.mxu0 0
    %587 = vmatpush1.bf16.xpose.msra.mxu0 0
    %588 = vmatprep.subr.bf16.mxu0 0
    %589 = vmatpush1.bf16.xpose.msra.mxu0 0
    %590 = vmatprep.mubr.bf16.mxu0 0
    %591 = vmatmul.mubr.bf16.gmra.mrb[0].mxu0 %v553
    %v592 = vpop.f32.mrb[0].mxu0
    %v593 = vadd.f32 %v96, %v592
    %v594 = vpop.f32.mrb[0].mxu0
    %v595 = vpop.f32.mrb[0].mxu0
    %v596 = vadd.f32 %v97, %v595
    %v597 = vpop.f32.mrb[0].mxu0
    %598 = vdwg.mxu0
    %v599 = vsel %vm235, %v593, -inf
    %600 = vmax.xlane.f32.xlu0 %v599
    %v601 = vpop.xlane.xlu0 %600
    %v602 = vsel %vm235, %v596, -inf
    %603 = vmax.xlane.f32.xlu0 %v602
    %v604 = vpop.xlane.xlu0 %603
    %v605 = vsub.f32 %v593, %v601
    %v606 = vsub.f32 %v596, %v604
    %v607 = vmul.f32 %v605, 1.442695
    %v608 = vpow.pop %v607
    %v609 = vmul.f32 %v606, 1.442695
    %v610 = vpow.pop %v609
    %v611 = vsel %vm235, %v608, 0.0
    %612 = vadd.xlane.f32.xlu0 %v611
    %v613 = vpop.xlane.xlu0 %612
    %v614 = vsel %vm235, %v610, 0.0
    %615 = vadd.xlane.f32.xlu0 %v614
    %v616 = vpop.xlane.xlu0 %615
    %v617 = vrcp.pop %v613
    %v618 = vrcp.pop %v616
    %v619 = vmul.f32 %v608, %v617
    %v620 = vmul.f32 %v610, %v618
    %v621 = vpack.c.bf16 %v620, %v619
    %622 = vrot.lane.b32.xlu0 %v182, 32
    %v623 = vpop.permute.xlu0 %622
    %v626 = vsel %vm235, %v621, 0
    %628 = vmatprep.subr.bf16.mxu0 0
    %629 = vmatpush1.bf16.msra.mxu0 %v623
    %630 = vmatprep.subr.bf16.mxu0 0
    %631 = vmatpush1.bf16.msra.mxu0 0
    %632 = vmatprep.subr.bf16.mxu0 0
    %633 = vmatpush1.bf16.msra.mxu0 0
    %634 = vmatprep.subr.bf16.mxu0 0
    %635 = vmatpush1.bf16.msra.mxu0 0
    %636 = vmatprep.subr.bf16.mxu0 0
    %637 = vmatpush1.bf16.msra.mxu0 0
    %638 = vmatprep.subr.bf16.mxu0 0
    %639 = vmatpush1.bf16.msra.mxu0 0
    %640 = vmatprep.subr.bf16.mxu0 0
    %641 = vmatpush1.bf16.msra.mxu0 0
    %642 = vmatprep.subr.bf16.mxu0 0
    %643 = vmatpush1.bf16.msra.mxu0 0
    %644 = vmatprep.subr.bf16.mxu0 0
    %645 = vmatpush1.bf16.msra.mxu0 0
    %646 = vmatprep.subr.bf16.mxu0 0
    %647 = vmatpush1.bf16.msra.mxu0 0
    %648 = vmatprep.subr.bf16.mxu0 0
    %649 = vmatpush1.bf16.msra.mxu0 0
    %650 = vmatprep.subr.bf16.mxu0 0
    %651 = vmatpush1.bf16.msra.mxu0 0
    %652 = vmatprep.subr.bf16.mxu0 0
    %653 = vmatpush1.bf16.msra.mxu0 0
    %654 = vmatprep.subr.bf16.mxu0 0
    %655 = vmatpush1.bf16.msra.mxu0 0
    %656 = vmatprep.subr.bf16.mxu0 0
    %657 = vmatpush1.bf16.msra.mxu0 0
    %658 = vmatprep.subr.bf16.mxu0 0
    %659 = vmatpush1.bf16.msra.mxu0 0
    %660 = vmatprep.mubr.bf16.mxu0 0
    %661 = vmatmul.mubr.bf16.gmra.mrb[0].mxu0 %v626
    %v662 = vpop.f32.mrb[0].mxu0
    %v663 = vadd.f32 0.0, %v662
    %v664 = vpop.f32.mrb[0].mxu0
    %v665 = vpop.f32.mrb[0].mxu0
    %v666 = vadd.f32 0.0, %v665
    %v667 = vpop.f32.mrb[0].mxu0
    %668 = vdwg.mxu0
    %v669 = vadd.f32 %v546, %v663
    %v670 = vadd.f32 %v547, %v666
    %v671 = vld [vmem:[#allocation10 + $0x1] ss:$0 sm:$0xff]
    %v672 = vadd.f32 %v669, %v671
    %v673 = vadd.f32 %v670, %v671
    %v674 = vadd.f32 %v90, %v672
    %v675 = vadd.f32 %v91, %v673
    %v676 = vld [vmem:[#allocation10 + $0x6] ss:$0 sm:$0xff]
    %v677 = vld [vmem:[#allocation10 + $0x7] ss:$0 sm:$0xff]
    %v678 = vsel %vm135, %v674, 0.0
    %679 = vadd.xlane.f32.xlu0 %v678
    %v680 = vpop.xlane.xlu0 %679
    %v681 = vsel %vm135, %v675, 0.0
    %682 = vadd.xlane.f32.xlu0 %v681
    %v683 = vpop.xlane.xlu0 %682
    %v684 = vrcp.pop 32.0
    %v685 = vmul.f32 %v680, %v684
    %v686 = vmul.f32 %v683, %v684
    %v687 = vsub.f32 %v674, %v685
    %v688 = vsub.f32 %v675, %v686
    %v689 = vmul.f32 %v687, %v687
    %v690 = vmul.f32 %v688, %v688
    %v691 = vsel %vm135, %v689, 0.0
    %692 = vadd.xlane.f32.xlu0 %v691
    %v693 = vpop.xlane.xlu0 %692
    %v694 = vsel %vm135, %v690, 0.0
    %695 = vadd.xlane.f32.xlu0 %v694
    %v696 = vpop.xlane.xlu0 %695
    %v697 = vmul.f32 %v693, 0.032258064
    %v698 = vmul.f32 %v696, 0.032258064
    %v699 = vrsqrt.pop %v697
    %v700 = vmul.f32 %v697, %v699
    %vm701 = vcmp.eq.f32.partialorder %v697, inf
    %v702 = vsel %vm701, %v697, %v700
    %vm703 = vcmp.eq.f32.partialorder %v697, 0.0
    %v704 = vand.u32 %v697, 2147483648
    %v705 = vsel %vm703, %v704, %v702
    %v706 = vrsqrt.pop %v698
    %v707 = vmul.f32 %v698, %v706
    %vm708 = vcmp.eq.f32.partialorder %v698, inf
    %v709 = vsel %vm708, %v698, %v707
    %vm710 = vcmp.eq.f32.partialorder %v698, 0.0
    %v711 = vand.u32 %v698, 2147483648
    %v712 = vsel %vm710, %v711, %v709
    %v713 = vadd.f32 %v705, 1e-06
    %v714 = vadd.f32 %v712, 1e-06
    %v715 = vrcp.pop %v713
    %v716 = vrcp.pop %v714
    %v717 = vmul.f32 %v687, %v715
    %v718 = vmul.f32 %v688, %v716
    %v719 = vmul.f32 %v676, %v717
    %v720 = vmul.f32 %v676, %v718
    %v721 = vadd.f32 %v719, %v677
    %v722 = vadd.f32 %v720, %v677
    %v723 = vld [vmem:[#allocation8 + $0x20] sm:$0xff]
    %v724 = vld [vmem:[#allocation8 + $0x28] sm:$0xff]
    %v725 = vld [vmem:[#allocation8 + $0x30] sm:$0xff]
    %v726 = vld [vmem:[#allocation8 + $0x38] sm:$0xff]
    %v727 = vpack.c.bf16 %v722, %v721
    %v728 = vld [vmem:[#allocation10 + $0xa] ss:$0 sm:$0xff]
    %v733 = vunpack.c.h.b16 %v723
    %v734 = vunpack.c.h.b16 %v724
    %v735 = vunpack.c.h.b16 %v725
    %v736 = vunpack.c.h.b16 %v726
    %v737 = vpack.c.b16 %v734, %v733
    %v738 = vpack.c.b16 %v736, %v735
    %739 = vrot.lane.b32.xlu0 %v737, 96
    %v740 = vpop.permute.xlu0 %739
    %741 = vrot.lane.b32.xlu0 %v738, 96
    %v742 = vpop.permute.xlu0 %741
    %746 = vrot.lane.b32.xlu0 %v728, 96
    %v747 = vpop.permute.xlu0 %746
    %v750 = vsel %vm135, %v727, 0
    %752 = vmatprep.subr.bf16.mxu0 0
    %753 = vmatpush1.bf16.msra.mxu0 %v740
    %754 = vmatprep.subr.bf16.mxu0 0
    %755 = vmatpush1.bf16.msra.mxu0 %v742
    %756 = vmatprep.subr.bf16.mxu0 0
    %757 = vmatpush1.bf16.msra.mxu0 0
    %758 = vmatprep.subr.bf16.mxu0 0
    %759 = vmatpush1.bf16.msra.mxu0 0
    %760 = vmatprep.subr.bf16.mxu0 0
    %761 = vmatpush1.bf16.msra.mxu0 0
    %762 = vmatprep.subr.bf16.mxu0 0
    %763 = vmatpush1.bf16.msra.mxu0 0
    %764 = vmatprep.subr.bf16.mxu0 0
    %765 = vmatpush1.bf16.msra.mxu0 0
    %766 = vmatprep.subr.bf16.mxu0 0
    %767 = vmatpush1.bf16.msra.mxu0 0
    %768 = vmatprep.subr.bf16.mxu0 0
    %769 = vmatpush1.bf16.msra.mxu0 0
    %770 = vmatprep.subr.bf16.mxu0 0
    %771 = vmatpush1.bf16.msra.mxu0 0
    %772 = vmatprep.subr.bf16.mxu0 0
    %773 = vmatpush1.bf16.msra.mxu0 0
    %774 = vmatprep.subr.bf16.mxu0 0
    %775 = vmatpush1.bf16.msra.mxu0 0
    %776 = vmatprep.subr.bf16.mxu0 0
    %777 = vmatpush1.bf16.msra.mxu0 0
    %778 = vmatprep.subr.bf16.mxu0 0
    %779 = vmatpush1.bf16.msra.mxu0 0
    %780 = vmatprep.subr.bf16.mxu0 0
    %781 = vmatpush1.bf16.msra.mxu0 0
    %782 = vmatprep.subr.bf16.mxu0 0
    %783 = vmatpush1.bf16.msra.mxu0 0
    %784 = vmatprep.mubr.bf16.mxu0 0
    %785 = vmatmul.mubr.bf16.gmra.mrb[0].mxu0 %v750
    %v786 = vpop.f32.mrb[0].mxu0
    %v787 = vadd.f32 %v747, %v786
    %v788 = vpop.f32.mrb[0].mxu0
    %v789 = vpop.f32.mrb[0].mxu0
    %v790 = vadd.f32 %v747, %v789
    %v791 = vpop.f32.mrb[0].mxu0
    %792 = vdwg.mxu0
    %v793 = vpack.c.bf16 %v93, %v92
    %v794 = vpack.c.bf16 %v95, %v94
    %s795 = scalar_lea.vmem [#allocation10], 2
    %v796 = vld [vmem:[%s795] ss:$8 sm:$0x3]
    %v798 = vlaneseq
    %v799 = vshrl.u32 %v798, 7
    %v800 = vsub.s32 0, %v799
    %v801 = vrot.slane %v796, %v800
    %v802 = vlaneseq
    %v803 = vshrl.u32 %v802, 7
    %v804 = vsub.s32 1, %v803
    %v805 = vrot.slane %v796, %v804
    %v808 = vunpack.c.l.b16 %v723
    %v809 = vunpack.c.l.b16 %v724
    %v810 = vunpack.c.l.b16 %v725
    %v811 = vunpack.c.l.b16 %v726
    %v812 = vpack.c.b16 %v809, %v808
    %v813 = vpack.c.b16 %v811, %v810
    %v819 = vsel %vm135, %v793, 0
    %v822 = vsel %vm135, %v794, 0
    %824 = vmatprep.subr.bf16.mxu0 %v737
    %825 = vmatpush1.bf16.msra.mxu0 %v812
    %826 = vmatprep.subr.bf16.mxu0 %v738
    %827 = vmatpush1.bf16.msra.mxu0 %v813
    %828 = vmatprep.subr.bf16.mxu0 0
    %829 = vmatpush1.bf16.msra.mxu0 0
    %830 = vmatprep.subr.bf16.mxu0 0
    %831 = vmatpush1.bf16.msra.mxu0 0
    %832 = vmatprep.subr.bf16.mxu0 0
    %833 = vmatpush1.bf16.msra.mxu0 0
    %834 = vmatprep.subr.bf16.mxu0 0
    %835 = vmatpush1.bf16.msra.mxu0 0
    %836 = vmatprep.subr.bf16.mxu0 0
    %837 = vmatpush1.bf16.msra.mxu0 0
    %838 = vmatprep.subr.bf16.mxu0 0
    %839 = vmatpush1.bf16.msra.mxu0 0
    %840 = vmatprep.subr.bf16.mxu0 0
    %841 = vmatpush1.bf16.msra.mxu0 0
    %842 = vmatprep.subr.bf16.mxu0 0
    %843 = vmatpush1.bf16.msra.mxu0 0
    %844 = vmatprep.subr.bf16.mxu0 0
    %845 = vmatpush1.bf16.msra.mxu0 0
    %846 = vmatprep.subr.bf16.mxu0 0
    %847 = vmatpush1.bf16.msra.mxu0 0
    %848 = vmatprep.subr.bf16.mxu0 0
    %849 = vmatpush1.bf16.msra.mxu0 0
    %850 = vmatprep.subr.bf16.mxu0 0
    %851 = vmatpush1.bf16.msra.mxu0 0
    %852 = vmatprep.subr.bf16.mxu0 0
    %853 = vmatpush1.bf16.msra.mxu0 0
    %854 = vmatprep.subr.bf16.mxu0 0
    %855 = vmatpush1.bf16.msra.mxu0 0
    %856 = vmatprep.mubr.bf16.mxu0 0
    %857 = vmatmul.mubr.bf16.gmra.mrb[0].mxu0 %v819
    %v858 = vpop.f32.mrb[0].mxu0
    %v859 = vadd.f32 %v801, %v858
    %v860 = vpop.f32.mrb[0].mxu0
    %v861 = vadd.f32 %v805, %v860
    %v862 = vpop.f32.mrb[0].mxu0
    %v863 = vadd.f32 %v801, %v862
    %v864 = vpop.f32.mrb[0].mxu0
    %v865 = vadd.f32 %v805, %v864
    %866 = vmatprep.mubr.bf16.mxu0 0
    %867 = vmatmul.mubr.bf16.gmra.mrb[0].mxu0 %v822
    %v868 = vpop.f32.mrb[0].mxu0
    %v869 = vadd.f32 %v801, %v868
    %v870 = vpop.f32.mrb[0].mxu0
    %v871 = vadd.f32 %v805, %v870
    %v872 = vpop.f32.mrb[0].mxu0
    %v873 = vadd.f32 %v801, %v872
    %v874 = vpop.f32.mrb[0].mxu0
    %v875 = vadd.f32 %v805, %v874
    %876 = vdwg.mxu0
    %v877 = vpack.c.bf16 %v790, %v787
    %v878 = vpack.c.bf16 %v863, %v859
    %v879 = vpack.c.bf16 %v865, %v861
    %v880 = vpack.c.bf16 %v873, %v869
    %v881 = vpack.c.bf16 %v875, %v871
    %884 = vrot.lane.b32.xlu0 %v96, 112
    %v885 = vpop.permute.xlu0 %884
    %886 = vrot.lane.b32.xlu0 %v97, 112
    %v887 = vpop.permute.xlu0 %886
    %v891 = vsel %vm187, %v877, 0
    %v894 = vsel %vm187, %v879, 0
    %v897 = vsel %vm187, %v881, 0
    %899 = vmatprep.subr.bf16.mxu0 0
    %900 = vmatpush1.bf16.xpose.msra.mxu0 %v894
    %901 = vmatprep.subr.bf16.mxu0 0
    %902 = vmatpush1.bf16.xpose.msra.mxu0 %v897
    %903 = vmatprep.subr.bf16.mxu0 0
    %904 = vmatpush1.bf16.xpose.msra.mxu0 0
    %905 = vmatprep.subr.bf16.mxu0 0
    %906 = vmatpush1.bf16.xpose.msra.mxu0 0
    %907 = vmatprep.subr.bf16.mxu0 0
    %908 = vmatpush1.bf16.xpose.msra.mxu0 0
    %909 = vmatprep.subr.bf16.mxu0 0
    %910 = vmatpush1.bf16.xpose.msra.mxu0 0
    %911 = vmatprep.subr.bf16.mxu0 0
    %912 = vmatpush1.bf16.xpose.msra.mxu0 0
    %913 = vmatprep.subr.bf16.mxu0 0
    %914 = vmatpush1.bf16.xpose.msra.mxu0 0
    %915 = vmatprep.subr.bf16.mxu0 0
    %916 = vmatpush1.bf16.xpose.msra.mxu0 0
    %917 = vmatprep.subr.bf16.mxu0 0
    %918 = vmatpush1.bf16.xpose.msra.mxu0 0
    %919 = vmatprep.subr.bf16.mxu0 0
    %920 = vmatpush1.bf16.xpose.msra.mxu0 0
    %921 = vmatprep.subr.bf16.mxu0 0
    %922 = vmatpush1.bf16.xpose.msra.mxu0 0
    %923 = vmatprep.subr.bf16.mxu0 0
    %924 = vmatpush1.bf16.xpose.msra.mxu0 0
    %925 = vmatprep.subr.bf16.mxu0 0
    %926 = vmatpush1.bf16.xpose.msra.mxu0 0
    %927 = vmatprep.subr.bf16.mxu0 0
    %928 = vmatpush1.bf16.xpose.msra.mxu0 0
    %929 = vmatprep.subr.bf16.mxu0 0
    %930 = vmatpush1.bf16.xpose.msra.mxu0 0
    %931 = vmatprep.mubr.bf16.mxu0 0
    %932 = vmatmul.mubr.bf16.gmra.mrb[0].mxu0 %v891
    %v933 = vpop.f32.mrb[0].mxu0
    %v934 = vadd.f32 %v885, %v933
    %v935 = vpop.f32.mrb[0].mxu0
    %v936 = vpop.f32.mrb[0].mxu0
    %v937 = vadd.f32 %v887, %v936
    %v938 = vpop.f32.mrb[0].mxu0
    %939 = vdwg.mxu0
    %v940 = vsel %vm135, %v934, -inf
    %941 = vmax.xlane.f32.xlu0 %v940
    %v942 = vpop.xlane.xlu0 %941
    %v943 = vsel %vm135, %v937, -inf
    %944 = vmax.xlane.f32.xlu0 %v943
    %v945 = vpop.xlane.xlu0 %944
    %v946 = vsub.f32 %v934, %v942
    %v947 = vsub.f32 %v937, %v945
    %v948 = vmul.f32 %v946, 1.442695
    %v949 = vpow.pop %v948
    %v950 = vmul.f32 %v947, 1.442695
    %v951 = vpow.pop %v950
    %v952 = vsel %vm135, %v949, 0.0
    %953 = vadd.xlane.f32.xlu0 %v952
    %v954 = vpop.xlane.xlu0 %953
    %v955 = vsel %vm135, %v951, 0.0
    %956 = vadd.xlane.f32.xlu0 %v955
    %v957 = vpop.xlane.xlu0 %956
    %v958 = vrcp.pop %v954
    %v959 = vrcp.pop %v957
    %v960 = vmul.f32 %v949, %v958
    %v961 = vmul.f32 %v951, %v959
    %v962 = vpack.c.bf16 %v961, %v960
    %964 = vrot.lane.b32.xlu0 %v877, 120
    %v965 = vpop.permute.xlu0 %964
    %968 = vrot.lane.b32.xlu0 %v879, 120
    %v969 = vpop.permute.xlu0 %968
    %970 = vrot.lane.b32.xlu0 %v881, 120
    %v971 = vpop.permute.xlu0 %970
    %v973 = vsel %vm187, %v965, 0
    %v976 = vsel %vm187, %v969, 0
    %v979 = vsel %vm187, %v971, 0
    %981 = vmatprep.subr.bf16.mxu0 0
    %982 = vmatpush1.bf16.xpose.msra.mxu0 %v976
    %983 = vmatprep.subr.bf16.mxu0 0
    %984 = vmatpush1.bf16.xpose.msra.mxu0 %v979
    %985 = vmatprep.subr.bf16.mxu0 0
    %986 = vmatpush1.bf16.xpose.msra.mxu0 0
    %987 = vmatprep.subr.bf16.mxu0 0
    %988 = vmatpush1.bf16.xpose.msra.mxu0 0
    %989 = vmatprep.subr.bf16.mxu0 0
    %990 = vmatpush1.bf16.xpose.msra.mxu0 0
    %991 = vmatprep.subr.bf16.mxu0 0
    %992 = vmatpush1.bf16.xpose.msra.mxu0 0
    %993 = vmatprep.subr.bf16.mxu0 0
    %994 = vmatpush1.bf16.xpose.msra.mxu0 0
    %995 = vmatprep.subr.bf16.mxu0 0
    %996 = vmatpush1.bf16.xpose.msra.mxu0 0
    %997 = vmatprep.subr.bf16.mxu0 0
    %998 = vmatpush1.bf16.xpose.msra.mxu0 0
    %999 = vmatprep.subr.bf16.mxu0 0
    %1000 = vmatpush1.bf16.xpose.msra.mxu0 0
    %1001 = vmatprep.subr.bf16.mxu0 0
    %1002 = vmatpush1.bf16.xpose.msra.mxu0 0
    %1003 = vmatprep.subr.bf16.mxu0 0
    %1004 = vmatpush1.bf16.xpose.msra.mxu0 0
    %1005 = vmatprep.subr.bf16.mxu0 0
    %1006 = vmatpush1.bf16.xpose.msra.mxu0 0
    %1007 = vmatprep.subr.bf16.mxu0 0
    %1008 = vmatpush1.bf16.xpose.msra.mxu0 0
    %1009 = vmatprep.subr.bf16.mxu0 0
    %1010 = vmatpush1.bf16.xpose.msra.mxu0 0
    %1011 = vmatprep.subr.bf16.mxu0 0
    %1012 = vmatpush1.bf16.xpose.msra.mxu0 0
    %1013 = vmatprep.mubr.bf16.mxu0 0
    %1014 = vmatmul.mubr.bf16.gmra.mrb[0].mxu0 %v973
    %v1015 = vpop.f32.mrb[0].mxu0
    %v1016 = vadd.f32 %v885, %v1015
    %v1017 = vpop.f32.mrb[0].mxu0
    %v1018 = vpop.f32.mrb[0].mxu0
    %v1019 = vadd.f32 %v887, %v1018
    %v1020 = vpop.f32.mrb[0].mxu0
    %1021 = vdwg.mxu0
    %v1022 = vsel %vm135, %v1016, -inf
    %1023 = vmax.xlane.f32.xlu0 %v1022
    %v1024 = vpop.xlane.xlu0 %1023
    %v1025 = vsel %vm135, %v1019, -inf
    %1026 = vmax.xlane.f32.xlu0 %v1025
    %v1027 = vpop.xlane.xlu0 %1026
    %v1028 = vsub.f32 %v1016, %v1024
    %v1029 = vsub.f32 %v1019, %v1027
    %v1030 = vmul.f32 %v1028, 1.442695
    %v1031 = vpow.pop %v1030
    %v1032 = vmul.f32 %v1029, 1.442695
    %v1033 = vpow.pop %v1032
    %v1034 = vsel %vm135, %v1031, 0.0
    %1035 = vadd.xlane.f32.xlu0 %v1034
    %v1036 = vpop.xlane.xlu0 %1035
    %v1037 = vsel %vm135, %v1033, 0.0
    %1038 = vadd.xlane.f32.xlu0 %v1037
    %v1039 = vpop.xlane.xlu0 %1038
    %v1040 = vrcp.pop %v1036
    %v1041 = vrcp.pop %v1039
    %v1042 = vmul.f32 %v1031, %v1040
    %v1043 = vmul.f32 %v1033, %v1041
    %v1044 = vpack.c.bf16 %v1043, %v1042
    %1047 = vrot.lane.b32.xlu0 %v878, 96
    %v1048 = vpop.permute.xlu0 %1047
    %1049 = vrot.lane.b32.xlu0 %v880, 96
    %v1050 = vpop.permute.xlu0 %1049
    %v1054 = vsel %vm135, %v1044, 0
    %1056 = vmatprep.subr.bf16.mxu0 0
    %1057 = vmatpush1.bf16.msra.mxu0 %v1048
    %1058 = vmatprep.subr.bf16.mxu0 0
    %1059 = vmatpush1.bf16.msra.mxu0 %v1050
    %1060 = vmatprep.subr.bf16.mxu0 0
    %1061 = vmatpush1.bf16.msra.mxu0 0
    %1062 = vmatprep.subr.bf16.mxu0 0
    %1063 = vmatpush1.bf16.msra.mxu0 0
    %1064 = vmatprep.subr.bf16.mxu0 0
    %1065 = vmatpush1.bf16.msra.mxu0 0
    %1066 = vmatprep.subr.bf16.mxu0 0
    %1067 = vmatpush1.bf16.msra.mxu0 0
    %1068 = vmatprep.subr.bf16.mxu0 0
    %1069 = vmatpush1.bf16.msra.mxu0 0
    %1070 = vmatprep.subr.bf16.mxu0 0
    %1071 = vmatpush1.bf16.msra.mxu0 0
    %1072 = vmatprep.subr.bf16.mxu0 0
    %1073 = vmatpush1.bf16.msra.mxu0 0
    %1074 = vmatprep.subr.bf16.mxu0 0
    %1075 = vmatpush1.bf16.msra.mxu0 0
    %1076 = vmatprep.subr.bf16.mxu0 0
    %1077 = vmatpush1.bf16.msra.mxu0 0
    %1078 = vmatprep.subr.bf16.mxu0 0
    %1079 = vmatpush1.bf16.msra.mxu0 0
    %1080 = vmatprep.subr.bf16.mxu0 0
    %1081 = vmatpush1.bf16.msra.mxu0 0
    %1082 = vmatprep.subr.bf16.mxu0 0
    %1083 = vmatpush1.bf16.msra.mxu0 0
    %1084 = vmatprep.subr.bf16.mxu0 0
    %1085 = vmatpush1.bf16.msra.mxu0 0
    %1086 = vmatprep.subr.bf16.mxu0 0
    %1087 = vmatpush1.bf16.msra.mxu0 0
    %1088 = vmatprep.mubr.bf16.mxu0 0
    %1089 = vmatmul.mubr.bf16.gmra.mrb[0].mxu0 %v1054
    %v1090 = vpop.f32.mrb[0].mxu0
    %v1091 = vadd.f32 0.0, %v1090
    %v1092 = vpop.f32.mrb[0].mxu0
    %v1093 = vpop.f32.mrb[0].mxu0
    %v1094 = vadd.f32 0.0, %v1093
    %v1095 = vpop.f32.mrb[0].mxu0
    %1096 = vdwg.mxu0
    %v1098 = vsel %vm135, %v962, 0
    %1100 = vmatprep.subr.bf16.mxu0 0
    %1101 = vmatpush1.bf16.msra.mxu0 %v878
    %1102 = vmatprep.subr.bf16.mxu0 0
    %1103 = vmatpush1.bf16.msra.mxu0 %v880
    %1104 = vmatprep.subr.bf16.mxu0 0
    %1105 = vmatpush1.bf16.msra.mxu0 0
    %1106 = vmatprep.subr.bf16.mxu0 0
    %1107 = vmatpush1.bf16.msra.mxu0 0
    %1108 = vmatprep.subr.bf16.mxu0 0
    %1109 = vmatpush1.bf16.msra.mxu0 0
    %1110 = vmatprep.subr.bf16.mxu0 0
    %1111 = vmatpush1.bf16.msra.mxu0 0
    %1112 = vmatprep.subr.bf16.mxu0 0
    %1113 = vmatpush1.bf16.msra.mxu0 0
    %1114 = vmatprep.subr.bf16.mxu0 0
    %1115 = vmatpush1.bf16.msra.mxu0 0
    %1116 = vmatprep.subr.bf16.mxu0 0
    %1117 = vmatpush1.bf16.msra.mxu0 0
    %1118 = vmatprep.subr.bf16.mxu0 0
    %1119 = vmatpush1.bf16.msra.mxu0 0
    %1120 = vmatprep.subr.bf16.mxu0 0
    %1121 = vmatpush1.bf16.msra.mxu0 0
    %1122 = vmatprep.subr.bf16.mxu0 0
    %1123 = vmatpush1.bf16.msra.mxu0 0
    %1124 = vmatprep.subr.bf16.mxu0 0
    %1125 = vmatpush1.bf16.msra.mxu0 0
    %1126 = vmatprep.subr.bf16.mxu0 0
    %1127 = vmatpush1.bf16.msra.mxu0 0
    %1128 = vmatprep.subr.bf16.mxu0 0
    %1129 = vmatpush1.bf16.msra.mxu0 0
    %1130 = vmatprep.subr.bf16.mxu0 0
    %1131 = vmatpush1.bf16.msra.mxu0 0
    %1132 = vmatprep.mubr.bf16.mxu0 0
    %1133 = vmatmul.mubr.bf16.gmra.mrb[0].mxu0 %v1098
    %v1134 = vpop.f32.mrb[0].mxu0
    %v1135 = vadd.f32 %v1091, %v1134
    %v1136 = vpop.f32.mrb[0].mxu0
    %v1137 = vpop.f32.mrb[0].mxu0
    %v1138 = vadd.f32 %v1094, %v1137
    %v1139 = vpop.f32.mrb[0].mxu0
    %1140 = vdwg.mxu0
    %1141 = vrot.lane.b32.xlu0 %v877, 112
    %v1142 = vpop.permute.xlu0 %1141
    %1143 = vrot.lane.b32.xlu0 %v879, 112
    %v1144 = vpop.permute.xlu0 %1143
    %1145 = vrot.lane.b32.xlu0 %v881, 112
    %v1146 = vpop.permute.xlu0 %1145
    %v1148 = vsel %vm187, %v1142, 0
    %v1151 = vsel %vm187, %v1144, 0
    %v1154 = vsel %vm187, %v1146, 0
    %1156 = vmatprep.subr.bf16.mxu0 0
    %1157 = vmatpush1.bf16.xpose.msra.mxu0 %v1151
    %1158 = vmatprep.subr.bf16.mxu0 0
    %1159 = vmatpush1.bf16.xpose.msra.mxu0 %v1154
    %1160 = vmatprep.subr.bf16.mxu0 0
    %1161 = vmatpush1.bf16.xpose.msra.mxu0 0
    %1162 = vmatprep.subr.bf16.mxu0 0
    %1163 = vmatpush1.bf16.xpose.msra.mxu0 0
    %1164 = vmatprep.subr.bf16.mxu0 0
    %1165 = vmatpush1.bf16.xpose.msra.mxu0 0
    %1166 = vmatprep.subr.bf16.mxu0 0
    %1167 = vmatpush1.bf16.xpose.msra.mxu0 0
    %1168 = vmatprep.subr.bf16.mxu0 0
    %1169 = vmatpush1.bf16.xpose.msra.mxu0 0
    %1170 = vmatprep.subr.bf16.mxu0 0
    %1171 = vmatpush1.bf16.xpose.msra.mxu0 0
    %1172 = vmatprep.subr.bf16.mxu0 0
    %1173 = vmatpush1.bf16.xpose.msra.mxu0 0
    %1174 = vmatprep.subr.bf16.mxu0 0
    %1175 = vmatpush1.bf16.xpose.msra.mxu0 0
    %1176 = vmatprep.subr.bf16.mxu0 0
    %1177 = vmatpush1.bf16.xpose.msra.mxu0 0
    %1178 = vmatprep.subr.bf16.mxu0 0
    %1179 = vmatpush1.bf16.xpose.msra.mxu0 0
    %1180 = vmatprep.subr.bf16.mxu0 0
    %1181 = vmatpush1.bf16.xpose.msra.mxu0 0
    %1182 = vmatprep.subr.bf16.mxu0 0
    %1183 = vmatpush1.bf16.xpose.msra.mxu0 0
    %1184 = vmatprep.subr.bf16.mxu0 0
    %1185 = vmatpush1.bf16.xpose.msra.mxu0 0
    %1186 = vmatprep.subr.bf16.mxu0 0
    %1187 = vmatpush1.bf16.xpose.msra.mxu0 0
    %1188 = vmatprep.mubr.bf16.mxu0 0
    %1189 = vmatmul.mubr.bf16.gmra.mrb[0].mxu0 %v1148
    %v1190 = vpop.f32.mrb[0].mxu0
    %v1191 = vadd.f32 %v885, %v1190
    %v1192 = vpop.f32.mrb[0].mxu0
    %v1193 = vpop.f32.mrb[0].mxu0
    %v1194 = vadd.f32 %v887, %v1193
    %v1195 = vpop.f32.mrb[0].mxu0
    %1196 = vdwg.mxu0
    %v1197 = vsel %vm135, %v1191, -inf
    %1198 = vmax.xlane.f32.xlu0 %v1197
    %v1199 = vpop.xlane.xlu0 %1198
    %v1200 = vsel %vm135, %v1194, -inf
    %1201 = vmax.xlane.f32.xlu0 %v1200
    %v1202 = vpop.xlane.xlu0 %1201
    %v1203 = vsub.f32 %v1191, %v1199
    %v1204 = vsub.f32 %v1194, %v1202
    %v1205 = vmul.f32 %v1203, 1.442695
    %v1206 = vpow.pop %v1205
    %v1207 = vmul.f32 %v1204, 1.442695
    %v1208 = vpow.pop %v1207
    %v1209 = vsel %vm135, %v1206, 0.0
    %1210 = vadd.xlane.f32.xlu0 %v1209
    %v1211 = vpop.xlane.xlu0 %1210
    %v1212 = vsel %vm135, %v1208, 0.0
    %1213 = vadd.xlane.f32.xlu0 %v1212
    %v1214 = vpop.xlane.xlu0 %1213
    %v1215 = vrcp.pop %v1211
    %v1216 = vrcp.pop %v1214
    %v1217 = vmul.f32 %v1206, %v1215
    %v1218 = vmul.f32 %v1208, %v1216
    %v1219 = vpack.c.bf16 %v1218, %v1217
    %1220 = vrot.lane.b32.xlu0 %v878, 64
    %v1221 = vpop.permute.xlu0 %1220
    %1222 = vrot.lane.b32.xlu0 %v880, 64
    %v1223 = vpop.permute.xlu0 %1222
    %v1227 = vsel %vm135, %v1219, 0
    %1229 = vmatprep.subr.bf16.mxu0 0
    %1230 = vmatpush1.bf16.msra.mxu0 %v1221
    %1231 = vmatprep.subr.bf16.mxu0 0
    %1232 = vmatpush1.bf16.msra.mxu0 %v1223
    %1233 = vmatprep.subr.bf16.mxu0 0
    %1234 = vmatpush1.bf16.msra.mxu0 0
    %1235 = vmatprep.subr.bf16.mxu0 0
    %1236 = vmatpush1.bf16.msra.mxu0 0
    %1237 = vmatprep.subr.bf16.mxu0 0
    %1238 = vmatpush1.bf16.msra.mxu0 0
    %1239 = vmatprep.subr.bf16.mxu0 0
    %1240 = vmatpush1.bf16.msra.mxu0 0
    %1241 = vmatprep.subr.bf16.mxu0 0
    %1242 = vmatpush1.bf16.msra.mxu0 0
    %1243 = vmatprep.subr.bf16.mxu0 0
    %1244 = vmatpush1.bf16.msra.mxu0 0
    %1245 = vmatprep.subr.bf16.mxu0 0
    %1246 = vmatpush1.bf16.msra.mxu0 0
    %1247 = vmatprep.subr.bf16.mxu0 0
    %1248 = vmatpush1.bf16.msra.mxu0 0
    %1249 = vmatprep.subr.bf16.mxu0 0
    %1250 = vmatpush1.bf16.msra.mxu0 0
    %1251 = vmatprep.subr.bf16.mxu0 0
    %1252 = vmatpush1.bf16.msra.mxu0 0
    %1253 = vmatprep.subr.bf16.mxu0 0
    %1254 = vmatpush1.bf16.msra.mxu0 0
    %1255 = vmatprep.subr.bf16.mxu0 0
    %1256 = vmatpush1.bf16.msra.mxu0 0
    %1257 = vmatprep.subr.bf16.mxu0 0
    %1258 = vmatpush1.bf16.msra.mxu0 0
    %1259 = vmatprep.subr.bf16.mxu0 0
    %1260 = vmatpush1.bf16.msra.mxu0 0
    %1261 = vmatprep.mubr.bf16.mxu0 0
    %1262 = vmatmul.mubr.bf16.gmra.mrb[0].mxu0 %v1227
    %v1263 = vpop.f32.mrb[0].mxu0
    %v1264 = vadd.f32 0.0, %v1263
    %v1265 = vpop.f32.mrb[0].mxu0
    %v1266 = vpop.f32.mrb[0].mxu0
    %v1267 = vadd.f32 0.0, %v1266
    %v1268 = vpop.f32.mrb[0].mxu0
    %1269 = vdwg.mxu0
    %v1270 = vadd.f32 %v1135, %v1264
    %v1271 = vadd.f32 %v1138, %v1267
    %1272 = vrot.lane.b32.xlu0 %v877, 104
    %v1273 = vpop.permute.xlu0 %1272
    %1274 = vrot.lane.b32.xlu0 %v879, 104
    %v1275 = vpop.permute.xlu0 %1274
    %1276 = vrot.lane.b32.xlu0 %v881, 104
    %v1277 = vpop.permute.xlu0 %1276
    %v1279 = vsel %vm187, %v1273, 0
    %v1282 = vsel %vm187, %v1275, 0
    %v1285 = vsel %vm187, %v1277, 0
    %1287 = vmatprep.subr.bf16.mxu0 0
    %1288 = vmatpush1.bf16.xpose.msra.mxu0 %v1282
    %1289 = vmatprep.subr.bf16.mxu0 0
    %1290 = vmatpush1.bf16.xpose.msra.mxu0 %v1285
    %1291 = vmatprep.subr.bf16.mxu0 0
    %1292 = vmatpush1.bf16.xpose.msra.mxu0 0
    %1293 = vmatprep.subr.bf16.mxu0 0
    %1294 = vmatpush1.bf16.xpose.msra.mxu0 0
    %1295 = vmatprep.subr.bf16.mxu0 0
    %1296 = vmatpush1.bf16.xpose.msra.mxu0 0
    %1297 = vmatprep.subr.bf16.mxu0 0
    %1298 = vmatpush1.bf16.xpose.msra.mxu0 0
    %1299 = vmatprep.subr.bf16.mxu0 0
    %1300 = vmatpush1.bf16.xpose.msra.mxu0 0
    %1301 = vmatprep.subr.bf16.mxu0 0
    %1302 = vmatpush1.bf16.xpose.msra.mxu0 0
    %1303 = vmatprep.subr.bf16.mxu0 0
    %1304 = vmatpush1.bf16.xpose.msra.mxu0 0
    %1305 = vmatprep.subr.bf16.mxu0 0
    %1306 = vmatpush1.bf16.xpose.msra.mxu0 0
    %1307 = vmatprep.subr.bf16.mxu0 0
    %1308 = vmatpush1.bf16.xpose.msra.mxu0 0
    %1309 = vmatprep.subr.bf16.mxu0 0
    %1310 = vmatpush1.bf16.xpose.msra.mxu0 0
    %1311 = vmatprep.subr.bf16.mxu0 0
    %1312 = vmatpush1.bf16.xpose.msra.mxu0 0
    %1313 = vmatprep.subr.bf16.mxu0 0
    %1314 = vmatpush1.bf16.xpose.msra.mxu0 0
    %1315 = vmatprep.subr.bf16.mxu0 0
    %1316 = vmatpush1.bf16.xpose.msra.mxu0 0
    %1317 = vmatprep.subr.bf16.mxu0 0
    %1318 = vmatpush1.bf16.xpose.msra.mxu0 0
    %1319 = vmatprep.mubr.bf16.mxu0 0
    %1320 = vmatmul.mubr.bf16.gmra.mrb[0].mxu0 %v1279
    %v1321 = vpop.f32.mrb[0].mxu0
    %v1322 = vadd.f32 %v885, %v1321
    %v1323 = vpop.f32.mrb[0].mxu0
    %v1324 = vpop.f32.mrb[0].mxu0
    %v1325 = vadd.f32 %v887, %v1324
    %v1326 = vpop.f32.mrb[0].mxu0
    %1327 = vdwg.mxu0
    %v1328 = vsel %vm135, %v1322, -inf
    %1329 = vmax.xlane.f32.xlu0 %v1328
    %v1330 = vpop.xlane.xlu0 %1329
    %v1331 = vsel %vm135, %v1325, -inf
    %1332 = vmax.xlane.f32.xlu0 %v1331
    %v1333 = vpop.xlane.xlu0 %1332
    %v1334 = vsub.f32 %v1322, %v1330
    %v1335 = vsub.f32 %v1325, %v1333
    %v1336 = vmul.f32 %v1334, 1.442695
    %v1337 = vpow.pop %v1336
    %v1338 = vmul.f32 %v1335, 1.442695
    %v1339 = vpow.pop %v1338
    %v1340 = vsel %vm135, %v1337, 0.0
    %1341 = vadd.xlane.f32.xlu0 %v1340
    %v1342 = vpop.xlane.xlu0 %1341
    %v1343 = vsel %vm135, %v1339, 0.0
    %1344 = vadd.xlane.f32.xlu0 %v1343
    %v1345 = vpop.xlane.xlu0 %1344
    %v1346 = vrcp.pop %v1342
    %v1347 = vrcp.pop %v1345
    %v1348 = vmul.f32 %v1337, %v1346
    %v1349 = vmul.f32 %v1339, %v1347
    %v1350 = vpack.c.bf16 %v1349, %v1348
    %1351 = vrot.lane.b32.xlu0 %v878, 32
    %v1352 = vpop.permute.xlu0 %1351
    %1353 = vrot.lane.b32.xlu0 %v880, 32
    %v1354 = vpop.permute.xlu0 %1353
    %v1358 = vsel %vm135, %v1350, 0
    %1360 = vmatprep.subr.bf16.mxu0 0
    %1361 = vmatpush1.bf16.msra.mxu0 %v1352
    %1362 = vmatprep.subr.bf16.mxu0 0
    %1363 = vmatpush1.bf16.msra.mxu0 %v1354
    %1364 = vmatprep.subr.bf16.mxu0 0
    %1365 = vmatpush1.bf16.msra.mxu0 0
    %1366 = vmatprep.subr.bf16.mxu0 0
    %1367 = vmatpush1.bf16.msra.mxu0 0
    %1368 = vmatprep.subr.bf16.mxu0 0
    %1369 = vmatpush1.bf16.msra.mxu0 0
    %1370 = vmatprep.subr.bf16.mxu0 0
    %1371 = vmatpush1.bf16.msra.mxu0 0
    %1372 = vmatprep.subr.bf16.mxu0 0
    %1373 = vmatpush1.bf16.msra.mxu0 0
    %1374 = vmatprep.subr.bf16.mxu0 0
    %1375 = vmatpush1.bf16.msra.mxu0 0
    %1376 = vmatprep.subr.bf16.mxu0 0
    %1377 = vmatpush1.bf16.msra.mxu0 0
    %1378 = vmatprep.subr.bf16.mxu0 0
    %1379 = vmatpush1.bf16.msra.mxu0 0
    %1380 = vmatprep.subr.bf16.mxu0 0
    %1381 = vmatpush1.bf16.msra.mxu0 0
    %1382 = vmatprep.subr.bf16.mxu0 0
    %1383 = vmatpush1.bf16.msra.mxu0 0
    %1384 = vmatprep.subr.bf16.mxu0 0
    %1385 = vmatpush1.bf16.msra.mxu0 0
    %1386 = vmatprep.subr.bf16.mxu0 0
    %1387 = vmatpush1.bf16.msra.mxu0 0
    %1388 = vmatprep.subr.bf16.mxu0 0
    %1389 = vmatpush1.bf16.msra.mxu0 0
    %1390 = vmatprep.subr.bf16.mxu0 0
    %1391 = vmatpush1.bf16.msra.mxu0 0
    %1392 = vmatprep.mubr.bf16.mxu0 0
    %1393 = vmatmul.mubr.bf16.gmra.mrb[0].mxu0 %v1358
    %v1394 = vpop.f32.mrb[0].mxu0
    %v1395 = vadd.f32 0.0, %v1394
    %v1396 = vpop.f32.mrb[0].mxu0
    %v1397 = vpop.f32.mrb[0].mxu0
    %v1398 = vadd.f32 0.0, %v1397
    %v1399 = vpop.f32.mrb[0].mxu0
    %1400 = vdwg.mxu0
    %v1401 = vadd.f32 %v1270, %v1395
    %v1402 = vadd.f32 %v1271, %v1398
    %v1403 = vld [vmem:[#allocation10 + $0x3] ss:$0 sm:$0xff]
    %v1404 = vadd.f32 %v1401, %v1403
    %v1405 = vadd.f32 %v1402, %v1403
    %v1406 = vadd.f32 %v721, %v1404
    %v1407 = vadd.f32 %v722, %v1405
    %v1408 = vld [vmem:[#allocation10 + $0x10] ss:$0 sm:$0xff]
    %v1409 = vld [vmem:[#allocation10 + $0x11] ss:$0 sm:$0xff]
    %v1410 = vsel %vm135, %v1406, 0.0
    %1411 = vadd.xlane.f32.xlu0 %v1410
    %v1412 = vpop.xlane.xlu0 %1411
    %v1413 = vsel %vm135, %v1407, 0.0
    %1414 = vadd.xlane.f32.xlu0 %v1413
    %v1415 = vpop.xlane.xlu0 %1414
    %v1416 = vmul.f32 %v1412, %v684
    %v1417 = vmul.f32 %v1415, %v684
    %v1418 = vsub.f32 %v1406, %v1416
    %v1419 = vsub.f32 %v1407, %v1417
    %v1420 = vmul.f32 %v1418, %v1418
    %v1421 = vmul.f32 %v1419, %v1419
    %v1422 = vsel %vm135, %v1420, 0.0
    %1423 = vadd.xlane.f32.xlu0 %v1422
    %v1424 = vpop.xlane.xlu0 %1423
    %v1425 = vsel %vm135, %v1421, 0.0
    %1426 = vadd.xlane.f32.xlu0 %v1425
    %v1427 = vpop.xlane.xlu0 %1426
    %v1428 = vmul.f32 %v1424, 0.032258064
    %v1429 = vmul.f32 %v1427, 0.032258064
    %v1430 = vrsqrt.pop %v1428
    %v1431 = vmul.f32 %v1428, %v1430
    %vm1432 = vcmp.eq.f32.partialorder %v1428, inf
    %v1433 = vsel %vm1432, %v1428, %v1431
    %vm1434 = vcmp.eq.f32.partialorder %v1428, 0.0
    %v1435 = vand.u32 %v1428, 2147483648
    %v1436 = vsel %vm1434, %v1435, %v1433
    %v1437 = vrsqrt.pop %v1429
    %v1438 = vmul.f32 %v1429, %v1437
    %vm1439 = vcmp.eq.f32.partialorder %v1429, inf
    %v1440 = vsel %vm1439, %v1429, %v1438
    %vm1441 = vcmp.eq.f32.partialorder %v1429, 0.0
    %v1442 = vand.u32 %v1429, 2147483648
    %v1443 = vsel %vm1441, %v1442, %v1440
    %v1444 = vadd.f32 %v1436, 1e-06
    %v1445 = vadd.f32 %v1443, 1e-06
    %v1446 = vrcp.pop %v1444
    %v1447 = vrcp.pop %v1445
    %v1448 = vmul.f32 %v1418, %v1446
    %v1449 = vmul.f32 %v1419, %v1447
    %v1450 = vmul.f32 %v1408, %v1448
    %v1451 = vmul.f32 %v1408, %v1449
    %v1452 = vadd.f32 %v1450, %v1409
    %v1453 = vadd.f32 %v1451, %v1409
    %v1454 = vld [vmem:[#allocation8 + $0x40] sm:$0xf]
    %v1455 = vld [vmem:[#allocation8 + $0x48] sm:$0xf]
    %v1456 = vld [vmem:[#allocation8 + $0x50] sm:$0xf]
    %v1457 = vld [vmem:[#allocation8 + $0x58] sm:$0xf]
    %v1458 = vld [vmem:[#allocation8 + $0x60] sm:$0xf]
    %v1459 = vld [vmem:[#allocation8 + $0x68] sm:$0xf]
    %v1460 = vld [vmem:[#allocation8 + $0x70] sm:$0xf]
    %v1461 = vld [vmem:[#allocation8 + $0x78] sm:$0xf]
    %v1462 = vld [vmem:[#allocation8 + $0x80] sm:$0xf]
    %v1463 = vld [vmem:[#allocation8 + $0x88] sm:$0xf]
    %v1464 = vld [vmem:[#allocation8 + $0x90] sm:$0xf]
    %v1465 = vld [vmem:[#allocation8 + $0x98] sm:$0xf]
    %v1466 = vpack.c.bf16 %v1453, %v1452
    %v1467 = vld [vmem:[#allocation10 + $0x4] ss:$0 sm:$0xff]
    %v1472 = vunpack.c.l.b16 %v1454
    %v1473 = vunpack.c.l.b16 %v1455
    %v1474 = vunpack.c.l.b16 %v1456
    %v1475 = vunpack.c.l.b16 %v1457
    %v1476 = vpack.c.b16 %v1473, %v1472
    %v1477 = vpack.c.b16 %v1475, %v1474
    %v1481 = vsel %vm135, %v1466, 0
    %1483 = vmatprep.subr.bf16.mxu0 0
    %1484 = vmatpush1.bf16.msra.mxu0 %v1476
    %1485 = vmatprep.subr.bf16.mxu0 0
    %1486 = vmatpush1.bf16.msra.mxu0 %v1477
    %1487 = vmatprep.subr.bf16.mxu0 0
    %1488 = vmatpush1.bf16.msra.mxu0 0
    %1489 = vmatprep.subr.bf16.mxu0 0
    %1490 = vmatpush1.bf16.msra.mxu0 0
    %1491 = vmatprep.subr.bf16.mxu0 0
    %1492 = vmatpush1.bf16.msra.mxu0 0
    %1493 = vmatprep.subr.bf16.mxu0 0
    %1494 = vmatpush1.bf16.msra.mxu0 0
    %1495 = vmatprep.subr.bf16.mxu0 0
    %1496 = vmatpush1.bf16.msra.mxu0 0
    %1497 = vmatprep.subr.bf16.mxu0 0
    %1498 = vmatpush1.bf16.msra.mxu0 0
    %1499 = vmatprep.subr.bf16.mxu0 0
    %1500 = vmatpush1.bf16.msra.mxu0 0
    %1501 = vmatprep.subr.bf16.mxu0 0
    %1502 = vmatpush1.bf16.msra.mxu0 0
    %1503 = vmatprep.subr.bf16.mxu0 0
    %1504 = vmatpush1.bf16.msra.mxu0 0
    %1505 = vmatprep.subr.bf16.mxu0 0
    %1506 = vmatpush1.bf16.msra.mxu0 0
    %1507 = vmatprep.subr.bf16.mxu0 0
    %1508 = vmatpush1.bf16.msra.mxu0 0
    %1509 = vmatprep.subr.bf16.mxu0 0
    %1510 = vmatpush1.bf16.msra.mxu0 0
    %1511 = vmatprep.subr.bf16.mxu0 0
    %1512 = vmatpush1.bf16.msra.mxu0 0
    %1513 = vmatprep.subr.bf16.mxu0 0
    %1514 = vmatpush1.bf16.msra.mxu0 0
    %1515 = vmatprep.mubr.bf16.mxu0 0
    %1516 = vmatmul.mubr.bf16.gmra.mrb[0].mxu0 %v1481
    %v1517 = vpop.f32.mrb[0].mxu0
    %v1518 = vadd.f32 %v1467, %v1517
    %v1519 = vpop.f32.mrb[0].mxu0
    %v1520 = vpop.f32.mrb[0].mxu0
    %v1521 = vadd.f32 %v1467, %v1520
    %v1522 = vpop.f32.mrb[0].mxu0
    %1523 = vdwg.mxu0
    %v1524 = vmax.f32 %v1518, 0.0
    %v1525 = vmax.f32 %v1521, 0.0
    %v1526 = vpack.c.bf16 %v1525, %v1524
    %v1527 = vld [vmem:[#allocation10 + $0x5] ss:$0 sm:$0xff]
    %v1536 = vunpack.c.l.b16 %v1458
    %v1537 = vunpack.c.l.b16 %v1459
    %v1538 = vunpack.c.l.b16 %v1460
    %v1539 = vunpack.c.l.b16 %v1461
    %v1540 = vunpack.c.l.b16 %v1462
    %v1541 = vunpack.c.l.b16 %v1463
    %v1542 = vunpack.c.l.b16 %v1464
    %v1543 = vunpack.c.l.b16 %v1465
    %v1544 = vpack.c.b16 %v1537, %v1536
    %v1545 = vpack.c.b16 %v1539, %v1538
    %v1546 = vpack.c.b16 %v1541, %v1540
    %v1547 = vpack.c.b16 %v1543, %v1542
    %vm1552 = vcmask 523264
    %v1554 = vsel %vm1552, %v1526, 0
    %1556 = vmatprep.subr.bf16.mxu0 0
    %1557 = vmatpush1.bf16.msra.mxu0 %v1544
    %1558 = vmatprep.subr.bf16.mxu0 0
    %1559 = vmatpush1.bf16.msra.mxu0 %v1545
    %1560 = vmatprep.subr.bf16.mxu0 0
    %1561 = vmatpush1.bf16.msra.mxu0 %v1546
    %1562 = vmatprep.subr.bf16.mxu0 0
    %1563 = vmatpush1.bf16.msra.mxu0 %v1547
    %1564 = vmatprep.subr.bf16.mxu0 0
    %1565 = vmatpush1.bf16.msra.mxu0 0
    %1566 = vmatprep.subr.bf16.mxu0 0
    %1567 = vmatpush1.bf16.msra.mxu0 0
    %1568 = vmatprep.subr.bf16.mxu0 0
    %1569 = vmatpush1.bf16.msra.mxu0 0
    %1570 = vmatprep.subr.bf16.mxu0 0
    %1571 = vmatpush1.bf16.msra.mxu0 0
    %1572 = vmatprep.subr.bf16.mxu0 0
    %1573 = vmatpush1.bf16.msra.mxu0 0
    %1574 = vmatprep.subr.bf16.mxu0 0
    %1575 = vmatpush1.bf16.msra.mxu0 0
    %1576 = vmatprep.subr.bf16.mxu0 0
    %1577 = vmatpush1.bf16.msra.mxu0 0
    %1578 = vmatprep.subr.bf16.mxu0 0
    %1579 = vmatpush1.bf16.msra.mxu0 0
    %1580 = vmatprep.subr.bf16.mxu0 0
    %1581 = vmatpush1.bf16.msra.mxu0 0
    %1582 = vmatprep.subr.bf16.mxu0 0
    %1583 = vmatpush1.bf16.msra.mxu0 0
    %1584 = vmatprep.subr.bf16.mxu0 0
    %1585 = vmatpush1.bf16.msra.mxu0 0
    %1586 = vmatprep.subr.bf16.mxu0 0
    %1587 = vmatpush1.bf16.msra.mxu0 0
    %1588 = vmatprep.mubr.bf16.mxu0 0
    %1589 = vmatmul.mubr.bf16.gmra.mrb[0].mxu0 %v1554
    %v1590 = vpop.f32.mrb[0].mxu0
    %v1591 = vadd.f32 %v1527, %v1590
    %v1592 = vpop.f32.mrb[0].mxu0
    %v1593 = vpop.f32.mrb[0].mxu0
    %v1594 = vadd.f32 %v1527, %v1593
    %v1595 = vpop.f32.mrb[0].mxu0
    %1596 = vdwg.mxu0
    %v1597 = vadd.f32 %v1452, %v1591
    %v1598 = vadd.f32 %v1453, %v1594
    %v1599 = vld [vmem:[#allocation10 + $0x12] ss:$0 sm:$0xff]
    %v1600 = vld [vmem:[#allocation10 + $0x13] ss:$0 sm:$0xff]
    %v1601 = vsel %vm135, %v1597, 0.0
    %1602 = vadd.xlane.f32.xlu0 %v1601
    %v1603 = vpop.xlane.xlu0 %1602
    %v1604 = vsel %vm135, %v1598, 0.0
    %1605 = vadd.xlane.f32.xlu0 %v1604
    %v1606 = vpop.xlane.xlu0 %1605
    %v1607 = vmul.f32 %v1603, %v684
    %v1608 = vmul.f32 %v1606, %v684
    %v1609 = vsub.f32 %v1597, %v1607
    %v1610 = vsub.f32 %v1598, %v1608
    %v1611 = vmul.f32 %v1609, %v1609
    %v1612 = vmul.f32 %v1610, %v1610
    %v1613 = vsel %vm135, %v1611, 0.0
    %1614 = vadd.xlane.f32.xlu0 %v1613
    %v1615 = vpop.xlane.xlu0 %1614
    %v1616 = vsel %vm135, %v1612, 0.0
    %1617 = vadd.xlane.f32.xlu0 %v1616
    %v1618 = vpop.xlane.xlu0 %1617
    %v1619 = vmul.f32 %v1615, 0.032258064
    %v1620 = vmul.f32 %v1618, 0.032258064
    %v1621 = vrsqrt.pop %v1619
    %v1622 = vmul.f32 %v1619, %v1621
    %vm1623 = vcmp.eq.f32.partialorder %v1619, inf
    %v1624 = vsel %vm1623, %v1619, %v1622
    %vm1625 = vcmp.eq.f32.partialorder %v1619, 0.0
    %v1626 = vand.u32 %v1619, 2147483648
    %v1627 = vsel %vm1625, %v1626, %v1624
    %v1628 = vrsqrt.pop %v1620
    %v1629 = vmul.f32 %v1620, %v1628
    %vm1630 = vcmp.eq.f32.partialorder %v1620, inf
    %v1631 = vsel %vm1630, %v1620, %v1629
    %vm1632 = vcmp.eq.f32.partialorder %v1620, 0.0
    %v1633 = vand.u32 %v1620, 2147483648
    %v1634 = vsel %vm1632, %v1633, %v1631
    %v1635 = vadd.f32 %v1627, 1e-06
    %v1636 = vadd.f32 %v1634, 1e-06
    %v1637 = vrcp.pop %v1635
    %v1638 = vrcp.pop %v1636
    %v1639 = vmul.f32 %v1609, %v1637
    %v1640 = vmul.f32 %v1610, %v1638
    %v1641 = vmul.f32 %v1599, %v1639
    %v1642 = vmul.f32 %v1599, %v1640
    %v1643 = vadd.f32 %v1641, %v1600
    %v1644 = vadd.f32 %v1642, %v1600
    %1645 = vst.msk [vmem:[#allocation11] sm:$0xff] %vm135, %v1643
    %1646 = vst.msk [vmem:[#allocation11 + $0x8] sm:$0xff] %vm135, %v1644
    // Predicated region
    $region42: #{tpu_custom_call.1} parent=1 // pred_check
      _
    $region43: #{tpu_custom_call.1} parent=1 // pred_check_branch
      %1648 = sbr.rel (0) target = $region45
    $region44: #{tpu_custom_call.1} parent=1 // pred_region
      %s1650 = ssub.s32 256, 256
      %1651 = vsyncadd [#allocation4], %s1650
      %s1652 = sshll.u32 [#allocation11], 4
      %s1653 = int_to_ptr.vmem [resolvable:$true] %s1652
      %1658 = dma.vmem_to_hbm [thread:$0]  %s1653, 256, %s5, [#allocation4], 128, 128, 8
    $region45: #{tpu_custom_call.1} parent=1 // pred_fallthru
      _
    // Predicated region
    $region46: #{tpu_custom_call.1} parent=1 // pred_check
      _
    $region47: #{tpu_custom_call.1} parent=1 // pred_check_branch
      %1660 = sbr.rel (0) target = $region49
    $region48: #{tpu_custom_call.1} parent=1 // pred_region
      %1661 = dma.done [#allocation4], 256
    $region49: #{tpu_custom_call.1} parent=1 // pred_fallthru
      _
    %1662 = vsyncpa [#allocation3], 1
    %1663 = vsyncpa [#allocation6], 1
    %1664 = vsyncpa [#allocation9], 1
    %1665 = vsyncpa [#allocation4], 1

</llo_original>
